<compile_context>
chip_gen: v7x
topology: tpu7x:2x2x1
jax: 0.10.0
libtpu: 0.0.40
codegen_flags: <defaults>
</compile_context>

<pallas_src>
import jax
import jax.numpy as jnp
from jax.experimental import pallas as pl
from jax.experimental.pallas import tpu as pltpu

LATENT = 512
OUTPUT = 512


def _round_up(n, m):
    return ((n + m - 1) // m) * m


def decoder_latent_kernel(x_ref, ea_ref, wh_ref, bh_ref,
                          woa_ref, wox_ref, bo_ref, out_ref):
    """One batch tile of the full forward pass; all matmuls on the MXU."""
    wh = wh_ref[...]                     # (512, 512) bf16, VMEM-resident
    bh = bh_ref[...]                     # (1, 512) f32 -> broadcast per layer

    # f32 tile from HBM, cast to bf16 in VMEM (no separate XLA cast pass).
    h = x_ref[...].astype(jnp.bfloat16)
    for _ in range(3):
        acc = jnp.dot(h, wh, preferred_element_type=jnp.float32) + bh
        h = jnp.maximum(acc, 0.0).astype(jnp.bfloat16)

    # out(cat(eA, h)) = eA @ WoA + h @ WoX + bo  (concat fused into 2 matmuls)
    ea = ea_ref[...].astype(jnp.bfloat16)
    y = (jnp.dot(ea, woa_ref[...], preferred_element_type=jnp.float32)
         + jnp.dot(h, wox_ref[...], preferred_element_type=jnp.float32)
         + bo_ref[...])
    out_ref[...] = y.astype(out_ref.dtype)


def _vmem_budget_bytes(bm, out_itemsize):
    """Rough VMEM budget for the pipeline; capped for v7x's 64 MiB VMEM."""
    x_tile = bm * LATENT * 4                    # f32 input tile
    ea_tile = bm * LATENT * 4
    out_tile = bm * OUTPUT * out_itemsize
    tiles = 2 * (x_tile + ea_tile + out_tile)   # double-buffered
    weights = 3 * LATENT * LATENT * 2 + 2 * OUTPUT * 4   # bf16 W's + f32 biases
    temps = 6 * bm * LATENT * 4                 # acc / h / epilogue temporaries
    return min(48 * 1024 * 1024, tiles + weights + temps + (4 << 20))


def decoder_latent(x, eA, params, *, bm=1024, out_dtype=jnp.float32,
                   vmem_limit_bytes=None):
    """x: (B, 512) f32, eA: (B, 512) f32 -> (B, 512) out_dtype."""
    B = x.shape[0]
    wh_t, bh, woa_t, wox_t, bo = params

    # Batch tile: multiple of 8 sublanes, grows with B, capped by request.
    # No artificial split into >=2 tiles (hurts single-TC v5e/v6e); for large
    # B the natural grid gives multiple "parallel" steps for v7x's 2 TCs.
    bm_eff = max(8, min((bm // 8) * 8, _round_up(B, 8)))
    grid = (pl.cdiv(B, bm_eff),)        # partial last tile handled by Pallas

    if vmem_limit_bytes is None:
        vmem_limit_bytes = _vmem_budget_bytes(bm_eff,
                                              jnp.dtype(out_dtype).itemsize)

    # Grid-constant operands live whole-array in VMEM: single-buffered, 1 DMA.
    const_vmem = pl.BlockSpec(memory_space=pltpu.MemorySpace.VMEM)

    out = pl.pallas_call(
        decoder_latent_kernel,
        out_shape=jax.ShapeDtypeStruct((B, OUTPUT), out_dtype),
        grid_spec=pltpu.PrefetchScalarGridSpec(
            num_scalar_prefetch=0,
            grid=grid,
            in_specs=[
                pl.BlockSpec((bm_eff, LATENT), lambda i: (i, 0)),   # x tile
                pl.BlockSpec((bm_eff, LATENT), lambda i: (i, 0)),   # eA tile
                const_vmem,                                         # W_hidden^T
                const_vmem,                                         # b_hidden
                const_vmem,                                         # W_out[:, :512]^T
                const_vmem,                                         # W_out[:, 512:]^T
                const_vmem,                                         # b_out
            ],
            out_specs=pl.BlockSpec((bm_eff, OUTPUT), lambda i: (i, 0)),
        ),
        compiler_params=pltpu.CompilerParams(
            dimension_semantics=("parallel",),
            vmem_limit_bytes=vmem_limit_bytes),
    )(x, eA, wh_t, bh, woa_t, wox_t, bo)

    return out


def init_torch_like_params(key):
    """Deterministic synthetic parameters matching nn.Linear shapes/init (f32)."""
    k1, k2, k3, k4 = jax.random.split(key, 4)
    bound_h = 1.0 / jnp.sqrt(LATENT)
    w_hidden = jax.random.uniform(k1, (LATENT, LATENT), jnp.float32,
                                  -bound_h, bound_h)
    b_hidden = jax.random.uniform(k2, (LATENT,), jnp.float32,
                                  -bound_h, bound_h)
    bound_o = 1.0 / jnp.sqrt(2 * LATENT)
    w_out = jax.random.uniform(k3, (OUTPUT, 2 * LATENT), jnp.float32,
                               -bound_o, bound_o)
    b_out = jax.random.uniform(k4, (OUTPUT,), jnp.float32, -bound_o, bound_o)
    return w_hidden, b_hidden, w_out, b_out


def pack_params(w_hidden, b_hidden, w_out, b_out):
    """Pre-transpose / split for the kernel; weights in bf16 (2x MXU rate,
    half the weight bytes), biases in f32 for the f32 accumulate."""
    wh_t = w_hidden.T.astype(jnp.bfloat16)               # (512, 512)
    woa_t = w_out[:, :LATENT].T.astype(jnp.bfloat16)     # acts on eA
    wox_t = w_out[:, LATENT:].T.astype(jnp.bfloat16)     # acts on h
    return (wh_t, b_hidden.reshape(1, LATENT),
            woa_t, wox_t, b_out.reshape(1, OUTPUT))


def decoder_latent_ref_matched(x, eA, params):
    """Pure-JAX reference with the same bf16/f32 numerics as the kernel."""
    wh_t, bh, woa_t, wox_t, bo = params
    h = x.astype(jnp.bfloat16)
    for _ in range(3):
        acc = jnp.dot(h, wh_t, preferred_element_type=jnp.float32) + bh
        h = jnp.maximum(acc, 0.0).astype(jnp.bfloat16)
    ea = eA.astype(jnp.bfloat16)
    return (jnp.dot(ea, woa_t, preferred_element_type=jnp.float32)
            + jnp.dot(h, wox_t, preferred_element_type=jnp.float32)
            + bo)


def decoder_latent_ref_f32(x, eA, w_hidden, b_hidden, w_out, b_out):
    """Full-f32 reference matching the original PyTorch module exactly."""
    h = x
    for _ in range(3):
        h = jnp.maximum(h @ w_hidden.T + b_hidden, 0.0)
    y = jnp.concatenate([eA, h], axis=1)
    return y @ w_out.T + b_out


if __name__ == "__main__":
    key = jax.random.PRNGKey(0)
    kp, kx, ke = jax.random.split(key, 3)

    w_hidden, b_hidden, w_out, b_out = init_torch_like_params(kp)
    params = pack_params(w_hidden, b_hidden, w_out, b_out)

    # Small ragged batch: exercises the partial-tile path and the fused concat.
    B = 12
    x = jax.random.normal(kx, (B, LATENT), jnp.float32)
    eA = jax.random.normal(ke, (B, LATENT), jnp.float32)

    out = decoder_latent(x, eA, params)
    out = jax.block_until_ready(out)

    ref_matched = decoder_latent_ref_matched(x, eA, params)
    ref_f32 = decoder_latent_ref_f32(x, eA, w_hidden, b_hidden, w_out, b_out)

    assert out.shape == (B, OUTPUT)
    # Tight check against matched-numerics (bf16 MXU / f32 acc) reference.
    assert jnp.allclose(out, ref_matched, atol=2e-2, rtol=2e-2)
    # Loose parity check against the exact-f32 PyTorch-equivalent forward.
    assert jnp.allclose(out, ref_f32, atol=1e-1, rtol=1e-1)

    print("KERNEL_OK")
</pallas_src>

<mosaic_0001>
module attributes {stable_mosaic.version = 11 : i64} {
  func.func @decoder_latent_kernel(%arg0: i32, %arg1: memref<16x512xf32, #tpu.memory_space<vmem>>, %arg2: memref<16x512xf32, #tpu.memory_space<vmem>>, %arg3: memref<512x512xbf16, #tpu.memory_space<vmem>>, %arg4: memref<1x512xf32, #tpu.memory_space<vmem>>, %arg5: memref<512x512xbf16, #tpu.memory_space<vmem>>, %arg6: memref<512x512xbf16, #tpu.memory_space<vmem>>, %arg7: memref<1x512xf32, #tpu.memory_space<vmem>>, %arg8: memref<16x512xf32, #tpu.memory_space<vmem>>) attributes {dimension_semantics = [#tpu.dimension_semantics<parallel>], iteration_bounds = array<i64: 1>, scalar_prefetch = 0 : i64, scratch_operands = 0 : i64, tpu.core_type = #tpu.core_type<tc>, window_params = [{transform_indices = @transform_0, window_bounds = array<i64: 16, 512>}, {transform_indices = @transform_1, window_bounds = array<i64: 16, 512>}, {pipeline_mode = #tpu.pipeline_mode<synchronous>, transform_indices = @transform_2, window_bounds = array<i64: 512, 512>}, {pipeline_mode = #tpu.pipeline_mode<synchronous>, transform_indices = @transform_3, window_bounds = array<i64: 1, 512>}, {pipeline_mode = #tpu.pipeline_mode<synchronous>, transform_indices = @transform_4, window_bounds = array<i64: 512, 512>}, {pipeline_mode = #tpu.pipeline_mode<synchronous>, transform_indices = @transform_5, window_bounds = array<i64: 512, 512>}, {pipeline_mode = #tpu.pipeline_mode<synchronous>, transform_indices = @transform_6, window_bounds = array<i64: 1, 512>}, {transform_indices = @transform_7, window_bounds = array<i64: 16, 512>}]} {
    %c0 = arith.constant 0 : index
    %c0_0 = arith.constant 0 : index
    %0 = vector.load %arg3[%c0, %c0_0] : memref<512x512xbf16, #tpu.memory_space<vmem>>, vector<512x512xbf16>
    %c0_1 = arith.constant 0 : index
    %c0_2 = arith.constant 0 : index
    %1 = vector.load %arg4[%c0_1, %c0_2] : memref<1x512xf32, #tpu.memory_space<vmem>>, vector<1x512xf32>
    %c0_3 = arith.constant 0 : index
    %c0_4 = arith.constant 0 : index
    %2 = vector.load %arg1[%c0_3, %c0_4] : memref<16x512xf32, #tpu.memory_space<vmem>>, vector<16x512xf32>
    %3 = arith.truncf %2 : vector<16x512xf32> to vector<16x512xbf16>
    %cst = arith.constant dense<0.000000e+00> : vector<16x512xf32>
    %4 = tpu.matmul %3, %0, %cst {dimension_numbers = #tpu.dot_dimension_numbers<[1], [0], [0], [1], [0, 0, 1, 1], [], []>} : vector<16x512xbf16>, vector<512x512xbf16>, vector<16x512xf32> -> vector<16x512xf32>
    %5 = vector.broadcast %1 : vector<1x512xf32> to vector<16x512xf32>
    %6 = arith.addf %4, %5 : vector<16x512xf32>
    %cst_5 = arith.constant 0.000000e+00 : f32
    %7 = vector.broadcast %cst_5 : f32 to vector<16x512xf32>
    %8 = arith.maximumf %6, %7 : vector<16x512xf32>
    %9 = arith.truncf %8 : vector<16x512xf32> to vector<16x512xbf16>
    %cst_6 = arith.constant dense<0.000000e+00> : vector<16x512xf32>
    %10 = tpu.matmul %9, %0, %cst_6 {dimension_numbers = #tpu.dot_dimension_numbers<[1], [0], [0], [1], [0, 0, 1, 1], [], []>} : vector<16x512xbf16>, vector<512x512xbf16>, vector<16x512xf32> -> vector<16x512xf32>
    %11 = vector.broadcast %1 : vector<1x512xf32> to vector<16x512xf32>
    %12 = arith.addf %10, %11 : vector<16x512xf32>
    %cst_7 = arith.constant 0.000000e+00 : f32
    %13 = vector.broadcast %cst_7 : f32 to vector<16x512xf32>
    %14 = arith.maximumf %12, %13 : vector<16x512xf32>
    %15 = arith.truncf %14 : vector<16x512xf32> to vector<16x512xbf16>
    %cst_8 = arith.constant dense<0.000000e+00> : vector<16x512xf32>
    %16 = tpu.matmul %15, %0, %cst_8 {dimension_numbers = #tpu.dot_dimension_numbers<[1], [0], [0], [1], [0, 0, 1, 1], [], []>} : vector<16x512xbf16>, vector<512x512xbf16>, vector<16x512xf32> -> vector<16x512xf32>
    %17 = vector.broadcast %1 : vector<1x512xf32> to vector<16x512xf32>
    %18 = arith.addf %16, %17 : vector<16x512xf32>
    %cst_9 = arith.constant 0.000000e+00 : f32
    %19 = vector.broadcast %cst_9 : f32 to vector<16x512xf32>
    %20 = arith.maximumf %18, %19 : vector<16x512xf32>
    %21 = arith.truncf %20 : vector<16x512xf32> to vector<16x512xbf16>
    %c0_10 = arith.constant 0 : index
    %c0_11 = arith.constant 0 : index
    %22 = vector.load %arg2[%c0_10, %c0_11] : memref<16x512xf32, #tpu.memory_space<vmem>>, vector<16x512xf32>
    %23 = arith.truncf %22 : vector<16x512xf32> to vector<16x512xbf16>
    %c0_12 = arith.constant 0 : index
    %c0_13 = arith.constant 0 : index
    %24 = vector.load %arg5[%c0_12, %c0_13] : memref<512x512xbf16, #tpu.memory_space<vmem>>, vector<512x512xbf16>
    %cst_14 = arith.constant dense<0.000000e+00> : vector<16x512xf32>
    %25 = tpu.matmul %23, %24, %cst_14 {dimension_numbers = #tpu.dot_dimension_numbers<[1], [0], [0], [1], [0, 0, 1, 1], [], []>} : vector<16x512xbf16>, vector<512x512xbf16>, vector<16x512xf32> -> vector<16x512xf32>
    %c0_15 = arith.constant 0 : index
    %c0_16 = arith.constant 0 : index
    %26 = vector.load %arg6[%c0_15, %c0_16] : memref<512x512xbf16, #tpu.memory_space<vmem>>, vector<512x512xbf16>
    %cst_17 = arith.constant dense<0.000000e+00> : vector<16x512xf32>
    %27 = tpu.matmul %21, %26, %cst_17 {dimension_numbers = #tpu.dot_dimension_numbers<[1], [0], [0], [1], [0, 0, 1, 1], [], []>} : vector<16x512xbf16>, vector<512x512xbf16>, vector<16x512xf32> -> vector<16x512xf32>
    %28 = arith.addf %25, %27 : vector<16x512xf32>
    %c0_18 = arith.constant 0 : index
    %c0_19 = arith.constant 0 : index
    %29 = vector.load %arg7[%c0_18, %c0_19] : memref<1x512xf32, #tpu.memory_space<vmem>>, vector<1x512xf32>
    %30 = vector.broadcast %29 : vector<1x512xf32> to vector<16x512xf32>
    %31 = arith.addf %28, %30 : vector<16x512xf32>
    %c0_20 = arith.constant 0 : index
    %c0_21 = arith.constant 0 : index
    %32 = vector.load %arg8[%c0_20, %c0_21] : memref<16x512xf32, #tpu.memory_space<vmem>>, vector<16x512xf32>
    tpu.vector_store %arg8[%c0_20, %c0_21], %31 {strides = array<i32>} : memref<16x512xf32, #tpu.memory_space<vmem>>, vector<16x512xf32>,
    return
  }
  func.func @transform_0(%arg0: i32) -> (i32, i32) {
    %c0_i32 = arith.constant 0 : i32
    %c0_i32_0 = arith.constant 0 : i32
    return %arg0, %c0_i32 : i32, i32
  }
  func.func @transform_1(%arg0: i32) -> (i32, i32) {
    %c0_i32 = arith.constant 0 : i32
    %c0_i32_0 = arith.constant 0 : i32
    return %arg0, %c0_i32 : i32, i32
  }
  func.func @transform_2(%arg0: i32) -> (i32, i32) {
    %c0_i32 = arith.constant 0 : i32
    %c0_i32_0 = arith.constant 0 : i32
    %c0_i32_1 = arith.constant 0 : i32
    return %c0_i32, %c0_i32_0 : i32, i32
  }
  func.func @transform_3(%arg0: i32) -> (i32, i32) {
    %c0_i32 = arith.constant 0 : i32
    %c0_i32_0 = arith.constant 0 : i32
    %c0_i32_1 = arith.constant 0 : i32
    return %c0_i32, %c0_i32_0 : i32, i32
  }
  func.func @transform_4(%arg0: i32) -> (i32, i32) {
    %c0_i32 = arith.constant 0 : i32
    %c0_i32_0 = arith.constant 0 : i32
    %c0_i32_1 = arith.constant 0 : i32
    return %c0_i32, %c0_i32_0 : i32, i32
  }
  func.func @transform_5(%arg0: i32) -> (i32, i32) {
    %c0_i32 = arith.constant 0 : i32
    %c0_i32_0 = arith.constant 0 : i32
    %c0_i32_1 = arith.constant 0 : i32
    return %c0_i32, %c0_i32_0 : i32, i32
  }
  func.func @transform_6(%arg0: i32) -> (i32, i32) {
    %c0_i32 = arith.constant 0 : i32
    %c0_i32_0 = arith.constant 0 : i32
    %c0_i32_1 = arith.constant 0 : i32
    return %c0_i32, %c0_i32_0 : i32, i32
  }
  func.func @transform_7(%arg0: i32) -> (i32, i32) {
    %c0_i32 = arith.constant 0 : i32
    %c0_i32_0 = arith.constant 0 : i32
    return %arg0, %c0_i32 : i32, i32
  }
}

</mosaic_0001>

<llo_original>
// kernel: tpu_custom_call.1
$region0: #{tpu_custom_call.1}
  #allocation0 [shape = 'u32[]', space=smem, size = 0x4, offset = 0x4, fixed_abs, tag = 'smem constant byte address 0x4 - core index']
  #allocation1 [shape = 'u32[144,128]{1,0:T(1,128)}', space=vmem, size = 0x12000, scoped, tag = 'internal scratch']
  %s0 = inlined_call_operand.hbm [shape: f32[12,512], index: 0, kind: input, shape index: {}]
  %s1 = inlined_call_operand.hbm [shape: f32[12,512], index: 1, kind: input, shape index: {}]
  %s2 = inlined_call_operand.hbm [shape: bf16[512,512], index: 2, kind: input, shape index: {}]
  %s3 = inlined_call_operand.vmem [shape: f32[1,512], index: 3, kind: input, shape index: {}]
  %s4 = inlined_call_operand.hbm [shape: bf16[512,512], index: 4, kind: input, shape index: {}]
  %s5 = inlined_call_operand.hbm [shape: bf16[512,512], index: 5, kind: input, shape index: {}]
  %s6 = inlined_call_operand.vmem [shape: f32[1,512], index: 6, kind: input, shape index: {}]
  %s7 = inlined_call_operand.hbm [shape: f32[12,512], index: 7, kind: output, shape index: {}]
  %s8 = sld [smem:[#allocation0]]
  $region58: #{tpu_custom_call.1} parent=0
    _
  %s10 = ssub.s32 1, %s8
  %s11 = scalar_select 0, %s10, %s8
  $region1: #{tpu_custom_call.1} parent=0
    #allocation2 [shape = 'u8[32768]{0}', space=vmem, size = 0x8000, scoped, tag = 'input window, operand 0, single buffered']
    #allocation3 [shape = 's32[1]{0}', space=sflag, size = 0x4, scoped, tag = 'scoped memory for tpu_custom_call.1']
    #allocation4 [shape = 's32[1]{0}', space=sflag, size = 0x4, scoped, tag = 'scoped memory for tpu_custom_call.1']
    #allocation5 [shape = 'u8[32768]{0}', space=vmem, size = 0x8000, scoped, tag = 'input window, operand 1, single buffered']
    #allocation6 [shape = 's32[1]{0}', space=sflag, size = 0x4, scoped, tag = 'scoped memory for tpu_custom_call.1']
    #allocation7 [shape = 'u8[524288]{0}', space=vmem, size = 0x80000, scoped, tag = 'input window, operand 2, single buffered']
    #allocation8 [shape = 'u8[524288]{0}', space=vmem, size = 0x80000, scoped, tag = 'input window, operand 4, single buffered']
    #allocation9 [shape = 's32[1]{0}', space=sflag, size = 0x4, scoped, tag = 'scoped memory for tpu_custom_call.1']
    #allocation10 [shape = 'u8[524288]{0}', space=vmem, size = 0x80000, scoped, tag = 'input window, operand 5, single buffered']
    #allocation11 [shape = 'u8[32768]{0}', space=vmem, size = 0x8000, scoped, tag = 'output window, operand 0, single buffered']
    %12 = vsyncpa [#allocation3], 0
    %13 = vsyncpa [#allocation6], 0
    %14 = vsyncpa [#allocation9], 0
    %15 = vsyncpa [#allocation4], 0
    // Predicated region
    $region2: #{tpu_custom_call.1} parent=1 // pred_check
      _
    $region3: #{tpu_custom_call.1} parent=1 // pred_check_branch
      %17 = sbr.rel (0) target = $region5
    $region4: #{tpu_custom_call.1} parent=1 // pred_region
      %s19 = ssub.s32 1024, 1024
      %20 = vsyncadd [#allocation3], %s19
      %s21 = sshll.u32 [#allocation2], 4
      %s22 = int_to_ptr.vmem [resolvable:$true] %s21
      %27 = dma.hbm_to_vmem [thread:$0]  %s0, 1024, %s22, [#allocation3], 512, 512, 32
    $region5: #{tpu_custom_call.1} parent=1 // pred_fallthru
      _
    // Predicated region
    $region6: #{tpu_custom_call.1} parent=1 // pred_check
      _
    $region7: #{tpu_custom_call.1} parent=1 // pred_check_branch
      %29 = sbr.rel (0) target = $region9
    $region8: #{tpu_custom_call.1} parent=1 // pred_region
      %s31 = ssub.s32 1024, 1024
      %32 = vsyncadd [#allocation6], %s31
      %s33 = sshll.u32 [#allocation5], 4
      %s34 = int_to_ptr.vmem [resolvable:$true] %s33
      %39 = dma.hbm_to_vmem [thread:$0]  %s1, 1024, %s34, [#allocation6], 512, 512, 32
    $region9: #{tpu_custom_call.1} parent=1 // pred_fallthru
      _
    // Predicated region
    $region10: #{tpu_custom_call.1} parent=1 // pred_check
      _
    $region11: #{tpu_custom_call.1} parent=1 // pred_check_branch
      %41 = sbr.rel (0) target = $region13
    $region12: #{tpu_custom_call.1} parent=1 // pred_region
      %s43 = ssub.s32 16384, 16384
      %44 = vsyncadd [#allocation6], %s43
      %s45 = sshll.u32 [#allocation7], 4
      %s46 = int_to_ptr.vmem [resolvable:$true] %s45
      %51 = dma.hbm_to_vmem [thread:$0]  %s2, 16384, %s46, [#allocation6], 256, 256, 16
    $region13: #{tpu_custom_call.1} parent=1 // pred_fallthru
      _
    // Predicated region
    $region14: #{tpu_custom_call.1} parent=1 // pred_check
      _
    $region15: #{tpu_custom_call.1} parent=1 // pred_check_branch
      %53 = sbr.rel (0) target = $region17
    $region16: #{tpu_custom_call.1} parent=1 // pred_region
      _
    $region17: #{tpu_custom_call.1} parent=1 // pred_fallthru
      _
    // Predicated region
    $region18: #{tpu_custom_call.1} parent=1 // pred_check
      _
    $region19: #{tpu_custom_call.1} parent=1 // pred_check_branch
      %55 = sbr.rel (0) target = $region21
    $region20: #{tpu_custom_call.1} parent=1 // pred_region
      %s57 = ssub.s32 16384, 16384
      %58 = vsyncadd [#allocation9], %s57
      %s59 = sshll.u32 [#allocation8], 4
      %s60 = int_to_ptr.vmem [resolvable:$true] %s59
      %65 = dma.hbm_to_vmem [thread:$0]  %s4, 16384, %s60, [#allocation9], 256, 256, 16
    $region21: #{tpu_custom_call.1} parent=1 // pred_fallthru
      _
    // Predicated region
    $region22: #{tpu_custom_call.1} parent=1 // pred_check
      _
    $region23: #{tpu_custom_call.1} parent=1 // pred_check_branch
      %67 = sbr.rel (0) target = $region25
    $region24: #{tpu_custom_call.1} parent=1 // pred_region
      %s69 = ssub.s32 16384, 16384
      %70 = vsyncadd [#allocation9], %s69
      %s71 = sshll.u32 [#allocation10], 4
      %s72 = int_to_ptr.vmem [resolvable:$true] %s71
      %77 = dma.hbm_to_vmem [thread:$0]  %s5, 16384, %s72, [#allocation9], 256, 256, 16
    $region25: #{tpu_custom_call.1} parent=1 // pred_fallthru
      _
    // Predicated region
    $region26: #{tpu_custom_call.1} parent=1 // pred_check
      _
    $region27: #{tpu_custom_call.1} parent=1 // pred_check_branch
      %79 = sbr.rel (0) target = $region29
    $region28: #{tpu_custom_call.1} parent=1 // pred_region
      _
    $region29: #{tpu_custom_call.1} parent=1 // pred_fallthru
      _
    // Predicated region
    $region30: #{tpu_custom_call.1} parent=1 // pred_check
      _
    $region31: #{tpu_custom_call.1} parent=1 // pred_check_branch
      %81 = sbr.rel (0) target = $region33
    $region32: #{tpu_custom_call.1} parent=1 // pred_region
      %82 = dma.done [#allocation3], 1024
    $region33: #{tpu_custom_call.1} parent=1 // pred_fallthru
      _
    // Predicated region
    $region34: #{tpu_custom_call.1} parent=1 // pred_check
      _
    $region35: #{tpu_custom_call.1} parent=1 // pred_check_branch
      %84 = sbr.rel (0) target = $region37
    $region36: #{tpu_custom_call.1} parent=1 // pred_region
      %85 = dma.done [#allocation6], 1024
    $region37: #{tpu_custom_call.1} parent=1 // pred_fallthru
      _
    // Predicated region
    $region38: #{tpu_custom_call.1} parent=1 // pred_check
      _
    $region39: #{tpu_custom_call.1} parent=1 // pred_check_branch
      %87 = sbr.rel (0) target = $region41
    $region40: #{tpu_custom_call.1} parent=1 // pred_region
      %88 = dma.done [#allocation6], 16384
    $region41: #{tpu_custom_call.1} parent=1 // pred_fallthru
      _
    // Predicated region
    $region42: #{tpu_custom_call.1} parent=1 // pred_check
      _
    $region43: #{tpu_custom_call.1} parent=1 // pred_check_branch
      %90 = sbr.rel (0) target = $region45
    $region44: #{tpu_custom_call.1} parent=1 // pred_region
      %91 = dma.done [#allocation9], 16384
    $region45: #{tpu_custom_call.1} parent=1 // pred_fallthru
      _
    // Predicated region
    $region46: #{tpu_custom_call.1} parent=1 // pred_check
      _
    $region47: #{tpu_custom_call.1} parent=1 // pred_check_branch
      %93 = sbr.rel (0) target = $region49
    $region48: #{tpu_custom_call.1} parent=1 // pred_region
      %94 = dma.done [#allocation9], 16384
    $region49: #{tpu_custom_call.1} parent=1 // pred_fallthru
      _
    %v95 = vld [vmem:[#allocation7] sm:$0xff]
    %v96 = vld [vmem:[#allocation7 + $0x8] sm:$0xff]
    %v97 = vld [vmem:[#allocation7 + $0x10] sm:$0xff]
    %v98 = vld [vmem:[#allocation7 + $0x18] sm:$0xff]
    %v99 = vld [vmem:[#allocation7 + $0x20] sm:$0xff]
    %v100 = vld [vmem:[#allocation7 + $0x28] sm:$0xff]
    %v101 = vld [vmem:[#allocation7 + $0x30] sm:$0xff]
    %v102 = vld [vmem:[#allocation7 + $0x38] sm:$0xff]
    %v103 = vld [vmem:[#allocation7 + $0x40] sm:$0xff]
    %v104 = vld [vmem:[#allocation7 + $0x48] sm:$0xff]
    %v105 = vld [vmem:[#allocation7 + $0x50] sm:$0xff]
    %v106 = vld [vmem:[#allocation7 + $0x58] sm:$0xff]
    %v107 = vld [vmem:[#allocation7 + $0x60] sm:$0xff]
    %v108 = vld [vmem:[#allocation7 + $0x68] sm:$0xff]
    %v109 = vld [vmem:[#allocation7 + $0x70] sm:$0xff]
    %v110 = vld [vmem:[#allocation7 + $0x78] sm:$0xff]
    %v111 = vld [vmem:[#allocation7 + $0x80] sm:$0xff]
    %v112 = vld [vmem:[#allocation7 + $0x88] sm:$0xff]
    %v113 = vld [vmem:[#allocation7 + $0x90] sm:$0xff]
    %v114 = vld [vmem:[#allocation7 + $0x98] sm:$0xff]
    %v115 = vld [vmem:[#allocation7 + $0xa0] sm:$0xff]
    %v116 = vld [vmem:[#allocation7 + $0xa8] sm:$0xff]
    %v117 = vld [vmem:[#allocation7 + $0xb0] sm:$0xff]
    %v118 = vld [vmem:[#allocation7 + $0xb8] sm:$0xff]
    %v119 = vld [vmem:[#allocation7 + $0xc0] sm:$0xff]
    %v120 = vld [vmem:[#allocation7 + $0xc8] sm:$0xff]
    %v121 = vld [vmem:[#allocation7 + $0xd0] sm:$0xff]
    %v122 = vld [vmem:[#allocation7 + $0xd8] sm:$0xff]
    %v123 = vld [vmem:[#allocation7 + $0xe0] sm:$0xff]
    %v124 = vld [vmem:[#allocation7 + $0xe8] sm:$0xff]
    %v125 = vld [vmem:[#allocation7 + $0xf0] sm:$0xff]
    %v126 = vld [vmem:[#allocation7 + $0xf8] sm:$0xff]
    %v127 = vld [vmem:[#allocation7 + $0x100] sm:$0xff]
    %v128 = vld [vmem:[#allocation7 + $0x108] sm:$0xff]
    %v129 = vld [vmem:[#allocation7 + $0x110] sm:$0xff]
    %v130 = vld [vmem:[#allocation7 + $0x118] sm:$0xff]
    %v131 = vld [vmem:[#allocation7 + $0x120] sm:$0xff]
    %v132 = vld [vmem:[#allocation7 + $0x128] sm:$0xff]
    %v133 = vld [vmem:[#allocation7 + $0x130] sm:$0xff]
    %v134 = vld [vmem:[#allocation7 + $0x138] sm:$0xff]
    %v135 = vld [vmem:[#allocation7 + $0x140] sm:$0xff]
    %v136 = vld [vmem:[#allocation7 + $0x148] sm:$0xff]
    %v137 = vld [vmem:[#allocation7 + $0x150] sm:$0xff]
    %v138 = vld [vmem:[#allocation7 + $0x158] sm:$0xff]
    %v139 = vld [vmem:[#allocation7 + $0x160] sm:$0xff]
    %v140 = vld [vmem:[#allocation7 + $0x168] sm:$0xff]
    %v141 = vld [vmem:[#allocation7 + $0x170] sm:$0xff]
    %v142 = vld [vmem:[#allocation7 + $0x178] sm:$0xff]
    %v143 = vld [vmem:[#allocation7 + $0x180] sm:$0xff]
    %v144 = vld [vmem:[#allocation7 + $0x188] sm:$0xff]
    %v145 = vld [vmem:[#allocation7 + $0x190] sm:$0xff]
    %v146 = vld [vmem:[#allocation7 + $0x198] sm:$0xff]
    %v147 = vld [vmem:[#allocation7 + $0x1a0] sm:$0xff]
    %v148 = vld [vmem:[#allocation7 + $0x1a8] sm:$0xff]
    %v149 = vld [vmem:[#allocation7 + $0x1b0] sm:$0xff]
    %v150 = vld [vmem:[#allocation7 + $0x1b8] sm:$0xff]
    %v151 = vld [vmem:[#allocation7 + $0x1c0] sm:$0xff]
    %v152 = vld [vmem:[#allocation7 + $0x1c8] sm:$0xff]
    %v153 = vld [vmem:[#allocation7 + $0x1d0] sm:$0xff]
    %v154 = vld [vmem:[#allocation7 + $0x1d8] sm:$0xff]
    %v155 = vld [vmem:[#allocation7 + $0x1e0] sm:$0xff]
    %v156 = vld [vmem:[#allocation7 + $0x1e8] sm:$0xff]
    %v157 = vld [vmem:[#allocation7 + $0x1f0] sm:$0xff]
    %v158 = vld [vmem:[#allocation7 + $0x1f8] sm:$0xff]
    %v159 = vld [vmem:[#allocation7 + $0x200] sm:$0xff]
    %v160 = vld [vmem:[#allocation7 + $0x208] sm:$0xff]
    %v161 = vld [vmem:[#allocation7 + $0x210] sm:$0xff]
    %v162 = vld [vmem:[#allocation7 + $0x218] sm:$0xff]
    %v163 = vld [vmem:[#allocation7 + $0x220] sm:$0xff]
    %v164 = vld [vmem:[#allocation7 + $0x228] sm:$0xff]
    %v165 = vld [vmem:[#allocation7 + $0x230] sm:$0xff]
    %v166 = vld [vmem:[#allocation7 + $0x238] sm:$0xff]
    %v167 = vld [vmem:[#allocation7 + $0x240] sm:$0xff]
    %v168 = vld [vmem:[#allocation7 + $0x248] sm:$0xff]
    %v169 = vld [vmem:[#allocation7 + $0x250] sm:$0xff]
    %v170 = vld [vmem:[#allocation7 + $0x258] sm:$0xff]
    %v171 = vld [vmem:[#allocation7 + $0x260] sm:$0xff]
    %v172 = vld [vmem:[#allocation7 + $0x268] sm:$0xff]
    %v173 = vld [vmem:[#allocation7 + $0x270] sm:$0xff]
    %v174 = vld [vmem:[#allocation7 + $0x278] sm:$0xff]
    %v175 = vld [vmem:[#allocation7 + $0x280] sm:$0xff]
    %v176 = vld [vmem:[#allocation7 + $0x288] sm:$0xff]
    %v177 = vld [vmem:[#allocation7 + $0x290] sm:$0xff]
    %v178 = vld [vmem:[#allocation7 + $0x298] sm:$0xff]
    %v179 = vld [vmem:[#allocation7 + $0x2a0] sm:$0xff]
    %v180 = vld [vmem:[#allocation7 + $0x2a8] sm:$0xff]
    %v181 = vld [vmem:[#allocation7 + $0x2b0] sm:$0xff]
    %v182 = vld [vmem:[#allocation7 + $0x2b8] sm:$0xff]
    %v183 = vld [vmem:[#allocation7 + $0x2c0] sm:$0xff]
    %v184 = vld [vmem:[#allocation7 + $0x2c8] sm:$0xff]
    %v185 = vld [vmem:[#allocation7 + $0x2d0] sm:$0xff]
    %v186 = vld [vmem:[#allocation7 + $0x2d8] sm:$0xff]
    %v187 = vld [vmem:[#allocation7 + $0x2e0] sm:$0xff]
    %v188 = vld [vmem:[#allocation7 + $0x2e8] sm:$0xff]
    %v189 = vld [vmem:[#allocation7 + $0x2f0] sm:$0xff]
    %v190 = vld [vmem:[#allocation7 + $0x2f8] sm:$0xff]
    %v191 = vld [vmem:[#allocation7 + $0x300] sm:$0xff]
    %v192 = vld [vmem:[#allocation7 + $0x308] sm:$0xff]
    %v193 = vld [vmem:[#allocation7 + $0x310] sm:$0xff]
    %v194 = vld [vmem:[#allocation7 + $0x318] sm:$0xff]
    %v195 = vld [vmem:[#allocation7 + $0x320] sm:$0xff]
    %v196 = vld [vmem:[#allocation7 + $0x328] sm:$0xff]
    %v197 = vld [vmem:[#allocation7 + $0x330] sm:$0xff]
    %v198 = vld [vmem:[#allocation7 + $0x338] sm:$0xff]
    %v199 = vld [vmem:[#allocation7 + $0x340] sm:$0xff]
    %v200 = vld [vmem:[#allocation7 + $0x348] sm:$0xff]
    %v201 = vld [vmem:[#allocation7 + $0x350] sm:$0xff]
    %v202 = vld [vmem:[#allocation7 + $0x358] sm:$0xff]
    %v203 = vld [vmem:[#allocation7 + $0x360] sm:$0xff]
    %v204 = vld [vmem:[#allocation7 + $0x368] sm:$0xff]
    %v205 = vld [vmem:[#allocation7 + $0x370] sm:$0xff]
    %v206 = vld [vmem:[#allocation7 + $0x378] sm:$0xff]
    %v207 = vld [vmem:[#allocation7 + $0x380] sm:$0xff]
    %v208 = vld [vmem:[#allocation7 + $0x388] sm:$0xff]
    %v209 = vld [vmem:[#allocation7 + $0x390] sm:$0xff]
    %v210 = vld [vmem:[#allocation7 + $0x398] sm:$0xff]
    %v211 = vld [vmem:[#allocation7 + $0x3a0] sm:$0xff]
    %v212 = vld [vmem:[#allocation7 + $0x3a8] sm:$0xff]
    %v213 = vld [vmem:[#allocation7 + $0x3b0] sm:$0xff]
    %v214 = vld [vmem:[#allocation7 + $0x3b8] sm:$0xff]
    %v215 = vld [vmem:[#allocation7 + $0x3c0] sm:$0xff]
    %v216 = vld [vmem:[#allocation7 + $0x3c8] sm:$0xff]
    %v217 = vld [vmem:[#allocation7 + $0x3d0] sm:$0xff]
    %v218 = vld [vmem:[#allocation7 + $0x3d8] sm:$0xff]
    %v219 = vld [vmem:[#allocation7 + $0x3e0] sm:$0xff]
    %v220 = vld [vmem:[#allocation7 + $0x3e8] sm:$0xff]
    %v221 = vld [vmem:[#allocation7 + $0x3f0] sm:$0xff]
    %v222 = vld [vmem:[#allocation7 + $0x3f8] sm:$0xff]
    %v223 = vld [vmem:[%s3] sm:$0xf]
    %v224 = vld [vmem:[#allocation2] sm:$0xff]
    %v225 = vld [vmem:[#allocation2 + $0x8] sm:$0xff]
    %v226 = vld [vmem:[#allocation2 + $0x10] sm:$0xff]
    %v227 = vld [vmem:[#allocation2 + $0x18] sm:$0xff]
    %v228 = vld [vmem:[#allocation2 + $0x20] sm:$0xff]
    %v229 = vld [vmem:[#allocation2 + $0x28] sm:$0xff]
    %v230 = vld [vmem:[#allocation2 + $0x30] sm:$0xff]
    %v231 = vld [vmem:[#allocation2 + $0x38] sm:$0xff]
    %v232 = vpack.c.bf16 %v228, %v224
    %v233 = vpack.c.bf16 %v229, %v225
    %v234 = vpack.c.bf16 %v230, %v226
    %v235 = vpack.c.bf16 %v231, %v227
    %v237 = vlaneseq
    %v238 = vshrl.u32 %v237, 7
    %v239 = vsub.s32 0, %v238
    %v240 = vrot.slane %v223, %v239
    %v241 = vlaneseq
    %v242 = vshrl.u32 %v241, 7
    %v243 = vsub.s32 1, %v242
    %v244 = vrot.slane %v223, %v243
    %v245 = vlaneseq
    %v246 = vshrl.u32 %v245, 7
    %v247 = vsub.s32 2, %v246
    %v248 = vrot.slane %v223, %v247
    %v249 = vlaneseq
    %v250 = vshrl.u32 %v249, 7
    %v251 = vsub.s32 3, %v250
    %v252 = vrot.slane %v223, %v251
    %v385 = vunpack.c.l.b16 %v95
    %v386 = vunpack.c.h.b16 %v95
    %v387 = vunpack.c.l.b16 %v96
    %v388 = vunpack.c.h.b16 %v96
    %v389 = vunpack.c.l.b16 %v97
    %v390 = vunpack.c.h.b16 %v97
    %v391 = vunpack.c.l.b16 %v98
    %v392 = vunpack.c.h.b16 %v98
    %v393 = vunpack.c.l.b16 %v99
    %v394 = vunpack.c.h.b16 %v99
    %v395 = vunpack.c.l.b16 %v100
    %v396 = vunpack.c.h.b16 %v100
    %v397 = vunpack.c.l.b16 %v101
    %v398 = vunpack.c.h.b16 %v101
    %v399 = vunpack.c.l.b16 %v102
    %v400 = vunpack.c.h.b16 %v102
    %v401 = vunpack.c.l.b16 %v103
    %v402 = vunpack.c.h.b16 %v103
    %v403 = vunpack.c.l.b16 %v104
    %v404 = vunpack.c.h.b16 %v104
    %v405 = vunpack.c.l.b16 %v105
    %v406 = vunpack.c.h.b16 %v105
    %v407 = vunpack.c.l.b16 %v106
    %v408 = vunpack.c.h.b16 %v106
    %v409 = vunpack.c.l.b16 %v107
    %v410 = vunpack.c.h.b16 %v107
    %v411 = vunpack.c.l.b16 %v108
    %v412 = vunpack.c.h.b16 %v108
    %v413 = vunpack.c.l.b16 %v109
    %v414 = vunpack.c.h.b16 %v109
    %v415 = vunpack.c.l.b16 %v110
    %v416 = vunpack.c.h.b16 %v110
    %v417 = vunpack.c.l.b16 %v111
    %v418 = vunpack.c.h.b16 %v111
    %v419 = vunpack.c.l.b16 %v112
    %v420 = vunpack.c.h.b16 %v112
    %v421 = vunpack.c.l.b16 %v113
    %v422 = vunpack.c.h.b16 %v113
    %v423 = vunpack.c.l.b16 %v114
    %v424 = vunpack.c.h.b16 %v114
    %v425 = vunpack.c.l.b16 %v115
    %v426 = vunpack.c.h.b16 %v115
    %v427 = vunpack.c.l.b16 %v116
    %v428 = vunpack.c.h.b16 %v116
    %v429 = vunpack.c.l.b16 %v117
    %v430 = vunpack.c.h.b16 %v117
    %v431 = vunpack.c.l.b16 %v118
    %v432 = vunpack.c.h.b16 %v118
    %v433 = vunpack.c.l.b16 %v119
    %v434 = vunpack.c.h.b16 %v119
    %v435 = vunpack.c.l.b16 %v120
    %v436 = vunpack.c.h.b16 %v120
    %v437 = vunpack.c.l.b16 %v121
    %v438 = vunpack.c.h.b16 %v121
    %v439 = vunpack.c.l.b16 %v122
    %v440 = vunpack.c.h.b16 %v122
    %v441 = vunpack.c.l.b16 %v123
    %v442 = vunpack.c.h.b16 %v123
    %v443 = vunpack.c.l.b16 %v124
    %v444 = vunpack.c.h.b16 %v124
    %v445 = vunpack.c.l.b16 %v125
    %v446 = vunpack.c.h.b16 %v125
    %v447 = vunpack.c.l.b16 %v126
    %v448 = vunpack.c.h.b16 %v126
    %v449 = vunpack.c.l.b16 %v127
    %v450 = vunpack.c.h.b16 %v127
    %v451 = vunpack.c.l.b16 %v128
    %v452 = vunpack.c.h.b16 %v128
    %v453 = vunpack.c.l.b16 %v129
    %v454 = vunpack.c.h.b16 %v129
    %v455 = vunpack.c.l.b16 %v130
    %v456 = vunpack.c.h.b16 %v130
    %v457 = vunpack.c.l.b16 %v131
    %v458 = vunpack.c.h.b16 %v131
    %v459 = vunpack.c.l.b16 %v132
    %v460 = vunpack.c.h.b16 %v132
    %v461 = vunpack.c.l.b16 %v133
    %v462 = vunpack.c.h.b16 %v133
    %v463 = vunpack.c.l.b16 %v134
    %v464 = vunpack.c.h.b16 %v134
    %v465 = vunpack.c.l.b16 %v135
    %v466 = vunpack.c.h.b16 %v135
    %v467 = vunpack.c.l.b16 %v136
    %v468 = vunpack.c.h.b16 %v136
    %v469 = vunpack.c.l.b16 %v137
    %v470 = vunpack.c.h.b16 %v137
    %v471 = vunpack.c.l.b16 %v138
    %v472 = vunpack.c.h.b16 %v138
    %v473 = vunpack.c.l.b16 %v139
    %v474 = vunpack.c.h.b16 %v139
    %v475 = vunpack.c.l.b16 %v140
    %v476 = vunpack.c.h.b16 %v140
    %v477 = vunpack.c.l.b16 %v141
    %v478 = vunpack.c.h.b16 %v141
    %v479 = vunpack.c.l.b16 %v142
    %v480 = vunpack.c.h.b16 %v142
    %v481 = vunpack.c.l.b16 %v143
    %v482 = vunpack.c.h.b16 %v143
    %v483 = vunpack.c.l.b16 %v144
    %v484 = vunpack.c.h.b16 %v144
    %v485 = vunpack.c.l.b16 %v145
    %v486 = vunpack.c.h.b16 %v145
    %v487 = vunpack.c.l.b16 %v146
    %v488 = vunpack.c.h.b16 %v146
    %v489 = vunpack.c.l.b16 %v147
    %v490 = vunpack.c.h.b16 %v147
    %v491 = vunpack.c.l.b16 %v148
    %v492 = vunpack.c.h.b16 %v148
    %v493 = vunpack.c.l.b16 %v149
    %v494 = vunpack.c.h.b16 %v149
    %v495 = vunpack.c.l.b16 %v150
    %v496 = vunpack.c.h.b16 %v150
    %v497 = vunpack.c.l.b16 %v151
    %v498 = vunpack.c.h.b16 %v151
    %v499 = vunpack.c.l.b16 %v152
    %v500 = vunpack.c.h.b16 %v152
    %v501 = vunpack.c.l.b16 %v153
    %v502 = vunpack.c.h.b16 %v153
    %v503 = vunpack.c.l.b16 %v154
    %v504 = vunpack.c.h.b16 %v154
    %v505 = vunpack.c.l.b16 %v155
    %v506 = vunpack.c.h.b16 %v155
    %v507 = vunpack.c.l.b16 %v156
    %v508 = vunpack.c.h.b16 %v156
    %v509 = vunpack.c.l.b16 %v157
    %v510 = vunpack.c.h.b16 %v157
    %v511 = vunpack.c.l.b16 %v158
    %v512 = vunpack.c.h.b16 %v158
    %v513 = vunpack.c.l.b16 %v159
    %v514 = vunpack.c.h.b16 %v159
    %v515 = vunpack.c.l.b16 %v160
    %v516 = vunpack.c.h.b16 %v160
    %v517 = vunpack.c.l.b16 %v161
    %v518 = vunpack.c.h.b16 %v161
    %v519 = vunpack.c.l.b16 %v162
    %v520 = vunpack.c.h.b16 %v162
    %v521 = vunpack.c.l.b16 %v163
    %v522 = vunpack.c.h.b16 %v163
    %v523 = vunpack.c.l.b16 %v164
    %v524 = vunpack.c.h.b16 %v164
    %v525 = vunpack.c.l.b16 %v165
    %v526 = vunpack.c.h.b16 %v165
    %v527 = vunpack.c.l.b16 %v166
    %v528 = vunpack.c.h.b16 %v166
    %v529 = vunpack.c.l.b16 %v167
    %v530 = vunpack.c.h.b16 %v167
    %v531 = vunpack.c.l.b16 %v168
    %v532 = vunpack.c.h.b16 %v168
    %v533 = vunpack.c.l.b16 %v169
    %v534 = vunpack.c.h.b16 %v169
    %v535 = vunpack.c.l.b16 %v170
    %v536 = vunpack.c.h.b16 %v170
    %v537 = vunpack.c.l.b16 %v171
    %v538 = vunpack.c.h.b16 %v171
    %v539 = vunpack.c.l.b16 %v172
    %v540 = vunpack.c.h.b16 %v172
    %v541 = vunpack.c.l.b16 %v173
    %v542 = vunpack.c.h.b16 %v173
    %v543 = vunpack.c.l.b16 %v174
    %v544 = vunpack.c.h.b16 %v174
    %v545 = vunpack.c.l.b16 %v175
    %v546 = vunpack.c.h.b16 %v175
    %v547 = vunpack.c.l.b16 %v176
    %v548 = vunpack.c.h.b16 %v176
    %v549 = vunpack.c.l.b16 %v177
    %v550 = vunpack.c.h.b16 %v177
    %v551 = vunpack.c.l.b16 %v178
    %v552 = vunpack.c.h.b16 %v178
    %v553 = vunpack.c.l.b16 %v179
    %v554 = vunpack.c.h.b16 %v179
    %v555 = vunpack.c.l.b16 %v180
    %v556 = vunpack.c.h.b16 %v180
    %v557 = vunpack.c.l.b16 %v181
    %v558 = vunpack.c.h.b16 %v181
    %v559 = vunpack.c.l.b16 %v182
    %v560 = vunpack.c.h.b16 %v182
    %v561 = vunpack.c.l.b16 %v183
    %v562 = vunpack.c.h.b16 %v183
    %v563 = vunpack.c.l.b16 %v184
    %v564 = vunpack.c.h.b16 %v184
    %v565 = vunpack.c.l.b16 %v185
    %v566 = vunpack.c.h.b16 %v185
    %v567 = vunpack.c.l.b16 %v186
    %v568 = vunpack.c.h.b16 %v186
    %v569 = vunpack.c.l.b16 %v187
    %v570 = vunpack.c.h.b16 %v187
    %v571 = vunpack.c.l.b16 %v188
    %v572 = vunpack.c.h.b16 %v188
    %v573 = vunpack.c.l.b16 %v189
    %v574 = vunpack.c.h.b16 %v189
    %v575 = vunpack.c.l.b16 %v190
    %v576 = vunpack.c.h.b16 %v190
    %v577 = vunpack.c.l.b16 %v191
    %v578 = vunpack.c.h.b16 %v191
    %v579 = vunpack.c.l.b16 %v192
    %v580 = vunpack.c.h.b16 %v192
    %v581 = vunpack.c.l.b16 %v193
    %v582 = vunpack.c.h.b16 %v193
    %v583 = vunpack.c.l.b16 %v194
    %v584 = vunpack.c.h.b16 %v194
    %v585 = vunpack.c.l.b16 %v195
    %v586 = vunpack.c.h.b16 %v195
    %v587 = vunpack.c.l.b16 %v196
    %v588 = vunpack.c.h.b16 %v196
    %v589 = vunpack.c.l.b16 %v197
    %v590 = vunpack.c.h.b16 %v197
    %v591 = vunpack.c.l.b16 %v198
    %v592 = vunpack.c.h.b16 %v198
    %v593 = vunpack.c.l.b16 %v199
    %v594 = vunpack.c.h.b16 %v199
    %v595 = vunpack.c.l.b16 %v200
    %v596 = vunpack.c.h.b16 %v200
    %v597 = vunpack.c.l.b16 %v201
    %v598 = vunpack.c.h.b16 %v201
    %v599 = vunpack.c.l.b16 %v202
    %v600 = vunpack.c.h.b16 %v202
    %v601 = vunpack.c.l.b16 %v203
    %v602 = vunpack.c.h.b16 %v203
    %v603 = vunpack.c.l.b16 %v204
    %v604 = vunpack.c.h.b16 %v204
    %v605 = vunpack.c.l.b16 %v205
    %v606 = vunpack.c.h.b16 %v205
    %v607 = vunpack.c.l.b16 %v206
    %v608 = vunpack.c.h.b16 %v206
    %v609 = vunpack.c.l.b16 %v207
    %v610 = vunpack.c.h.b16 %v207
    %v611 = vunpack.c.l.b16 %v208
    %v612 = vunpack.c.h.b16 %v208
    %v613 = vunpack.c.l.b16 %v209
    %v614 = vunpack.c.h.b16 %v209
    %v615 = vunpack.c.l.b16 %v210
    %v616 = vunpack.c.h.b16 %v210
    %v617 = vunpack.c.l.b16 %v211
    %v618 = vunpack.c.h.b16 %v211
    %v619 = vunpack.c.l.b16 %v212
    %v620 = vunpack.c.h.b16 %v212
    %v621 = vunpack.c.l.b16 %v213
    %v622 = vunpack.c.h.b16 %v213
    %v623 = vunpack.c.l.b16 %v214
    %v624 = vunpack.c.h.b16 %v214
    %v625 = vunpack.c.l.b16 %v215
    %v626 = vunpack.c.h.b16 %v215
    %v627 = vunpack.c.l.b16 %v216
    %v628 = vunpack.c.h.b16 %v216
    %v629 = vunpack.c.l.b16 %v217
    %v630 = vunpack.c.h.b16 %v217
    %v631 = vunpack.c.l.b16 %v218
    %v632 = vunpack.c.h.b16 %v218
    %v633 = vunpack.c.l.b16 %v219
    %v634 = vunpack.c.h.b16 %v219
    %v635 = vunpack.c.l.b16 %v220
    %v636 = vunpack.c.h.b16 %v220
    %v637 = vunpack.c.l.b16 %v221
    %v638 = vunpack.c.h.b16 %v221
    %v639 = vunpack.c.l.b16 %v222
    %v640 = vunpack.c.h.b16 %v222
    %v641 = vpack.c.b16 %v389, %v385
    %v642 = vpack.c.b16 %v390, %v386
    %v643 = vpack.c.b16 %v391, %v387
    %v644 = vpack.c.b16 %v392, %v388
    %v645 = vpack.c.b16 %v397, %v393
    %v646 = vpack.c.b16 %v398, %v394
    %v647 = vpack.c.b16 %v399, %v395
    %v648 = vpack.c.b16 %v400, %v396
    %v649 = vpack.c.b16 %v405, %v401
    %v650 = vpack.c.b16 %v406, %v402
    %v651 = vpack.c.b16 %v407, %v403
    %v652 = vpack.c.b16 %v408, %v404
    %v653 = vpack.c.b16 %v413, %v409
    %v654 = vpack.c.b16 %v414, %v410
    %v655 = vpack.c.b16 %v415, %v411
    %v656 = vpack.c.b16 %v416, %v412
    %v657 = vpack.c.b16 %v421, %v417
    %v658 = vpack.c.b16 %v422, %v418
    %v659 = vpack.c.b16 %v423, %v419
    %v660 = vpack.c.b16 %v424, %v420
    %v661 = vpack.c.b16 %v429, %v425
    %v662 = vpack.c.b16 %v430, %v426
    %v663 = vpack.c.b16 %v431, %v427
    %v664 = vpack.c.b16 %v432, %v428
    %v665 = vpack.c.b16 %v437, %v433
    %v666 = vpack.c.b16 %v438, %v434
    %v667 = vpack.c.b16 %v439, %v435
    %v668 = vpack.c.b16 %v440, %v436
    %v669 = vpack.c.b16 %v445, %v441
    %v670 = vpack.c.b16 %v446, %v442
    %v671 = vpack.c.b16 %v447, %v443
    %v672 = vpack.c.b16 %v448, %v444
    %v673 = vpack.c.b16 %v453, %v449
    %v674 = vpack.c.b16 %v454, %v450
    %v675 = vpack.c.b16 %v455, %v451
    %v676 = vpack.c.b16 %v456, %v452
    %v677 = vpack.c.b16 %v461, %v457
    %v678 = vpack.c.b16 %v462, %v458
    %v679 = vpack.c.b16 %v463, %v459
    %v680 = vpack.c.b16 %v464, %v460
    %v681 = vpack.c.b16 %v469, %v465
    %v682 = vpack.c.b16 %v470, %v466
    %v683 = vpack.c.b16 %v471, %v467
    %v684 = vpack.c.b16 %v472, %v468
    %v685 = vpack.c.b16 %v477, %v473
    %v686 = vpack.c.b16 %v478, %v474
    %v687 = vpack.c.b16 %v479, %v475
    %v688 = vpack.c.b16 %v480, %v476
    %v689 = vpack.c.b16 %v485, %v481
    %v690 = vpack.c.b16 %v486, %v482
    %v691 = vpack.c.b16 %v487, %v483
    %v692 = vpack.c.b16 %v488, %v484
    %v693 = vpack.c.b16 %v493, %v489
    %v694 = vpack.c.b16 %v494, %v490
    %v695 = vpack.c.b16 %v495, %v491
    %v696 = vpack.c.b16 %v496, %v492
    %v697 = vpack.c.b16 %v501, %v497
    %v698 = vpack.c.b16 %v502, %v498
    %v699 = vpack.c.b16 %v503, %v499
    %v700 = vpack.c.b16 %v504, %v500
    %v701 = vpack.c.b16 %v509, %v505
    %v702 = vpack.c.b16 %v510, %v506
    %v703 = vpack.c.b16 %v511, %v507
    %v704 = vpack.c.b16 %v512, %v508
    %v705 = vpack.c.b16 %v517, %v513
    %v706 = vpack.c.b16 %v518, %v514
    %v707 = vpack.c.b16 %v519, %v515
    %v708 = vpack.c.b16 %v520, %v516
    %v709 = vpack.c.b16 %v525, %v521
    %v710 = vpack.c.b16 %v526, %v522
    %v711 = vpack.c.b16 %v527, %v523
    %v712 = vpack.c.b16 %v528, %v524
    %v713 = vpack.c.b16 %v533, %v529
    %v714 = vpack.c.b16 %v534, %v530
    %v715 = vpack.c.b16 %v535, %v531
    %v716 = vpack.c.b16 %v536, %v532
    %v717 = vpack.c.b16 %v541, %v537
    %v718 = vpack.c.b16 %v542, %v538
    %v719 = vpack.c.b16 %v543, %v539
    %v720 = vpack.c.b16 %v544, %v540
    %v721 = vpack.c.b16 %v549, %v545
    %v722 = vpack.c.b16 %v550, %v546
    %v723 = vpack.c.b16 %v551, %v547
    %v724 = vpack.c.b16 %v552, %v548
    %v725 = vpack.c.b16 %v557, %v553
    %v726 = vpack.c.b16 %v558, %v554
    %v727 = vpack.c.b16 %v559, %v555
    %v728 = vpack.c.b16 %v560, %v556
    %v729 = vpack.c.b16 %v565, %v561
    %v730 = vpack.c.b16 %v566, %v562
    %v731 = vpack.c.b16 %v567, %v563
    %v732 = vpack.c.b16 %v568, %v564
    %v733 = vpack.c.b16 %v573, %v569
    %v734 = vpack.c.b16 %v574, %v570
    %v735 = vpack.c.b16 %v575, %v571
    %v736 = vpack.c.b16 %v576, %v572
    %v737 = vpack.c.b16 %v581, %v577
    %v738 = vpack.c.b16 %v582, %v578
    %v739 = vpack.c.b16 %v583, %v579
    %v740 = vpack.c.b16 %v584, %v580
    %v741 = vpack.c.b16 %v589, %v585
    %v742 = vpack.c.b16 %v590, %v586
    %v743 = vpack.c.b16 %v591, %v587
    %v744 = vpack.c.b16 %v592, %v588
    %v745 = vpack.c.b16 %v597, %v593
    %v746 = vpack.c.b16 %v598, %v594
    %v747 = vpack.c.b16 %v599, %v595
    %v748 = vpack.c.b16 %v600, %v596
    %v749 = vpack.c.b16 %v605, %v601
    %v750 = vpack.c.b16 %v606, %v602
    %v751 = vpack.c.b16 %v607, %v603
    %v752 = vpack.c.b16 %v608, %v604
    %v753 = vpack.c.b16 %v613, %v609
    %v754 = vpack.c.b16 %v614, %v610
    %v755 = vpack.c.b16 %v615, %v611
    %v756 = vpack.c.b16 %v616, %v612
    %v757 = vpack.c.b16 %v621, %v617
    %v758 = vpack.c.b16 %v622, %v618
    %v759 = vpack.c.b16 %v623, %v619
    %v760 = vpack.c.b16 %v624, %v620
    %v761 = vpack.c.b16 %v629, %v625
    %v762 = vpack.c.b16 %v630, %v626
    %v763 = vpack.c.b16 %v631, %v627
    %v764 = vpack.c.b16 %v632, %v628
    %v765 = vpack.c.b16 %v637, %v633
    %v766 = vpack.c.b16 %v638, %v634
    %v767 = vpack.c.b16 %v639, %v635
    %v768 = vpack.c.b16 %v640, %v636
    %897 = vmatprep.subr.bf16.mxu0 %v642
    %898 = vmatpush1.bf16.msra.mxu0 %v641
    %899 = vmatprep.subr.bf16.mxu0 %v646
    %900 = vmatpush1.bf16.msra.mxu0 %v645
    %901 = vmatprep.subr.bf16.mxu0 %v650
    %902 = vmatpush1.bf16.msra.mxu0 %v649
    %903 = vmatprep.subr.bf16.mxu0 %v654
    %904 = vmatpush1.bf16.msra.mxu0 %v653
    %905 = vmatprep.subr.bf16.mxu0 %v658
    %906 = vmatpush1.bf16.msra.mxu0 %v657
    %907 = vmatprep.subr.bf16.mxu0 %v662
    %908 = vmatpush1.bf16.msra.mxu0 %v661
    %909 = vmatprep.subr.bf16.mxu0 %v666
    %910 = vmatpush1.bf16.msra.mxu0 %v665
    %911 = vmatprep.subr.bf16.mxu0 %v670
    %912 = vmatpush1.bf16.msra.mxu0 %v669
    %913 = vmatprep.subr.bf16.mxu0 %v674
    %914 = vmatpush1.bf16.msra.mxu0 %v673
    %915 = vmatprep.subr.bf16.mxu0 %v678
    %916 = vmatpush1.bf16.msra.mxu0 %v677
    %917 = vmatprep.subr.bf16.mxu0 %v682
    %918 = vmatpush1.bf16.msra.mxu0 %v681
    %919 = vmatprep.subr.bf16.mxu0 %v686
    %920 = vmatpush1.bf16.msra.mxu0 %v685
    %921 = vmatprep.subr.bf16.mxu0 %v690
    %922 = vmatpush1.bf16.msra.mxu0 %v689
    %923 = vmatprep.subr.bf16.mxu0 %v694
    %924 = vmatpush1.bf16.msra.mxu0 %v693
    %925 = vmatprep.subr.bf16.mxu0 %v698
    %926 = vmatpush1.bf16.msra.mxu0 %v697
    %927 = vmatprep.subr.bf16.mxu0 %v702
    %928 = vmatpush1.bf16.msra.mxu0 %v701
    %929 = vmatprep.mubr.bf16.mxu0 %v233
    %930 = vmatmul.mubr.bf16.gmra.mrb[0].mxu0 %v232
    %v931 = vpop.f32.mrb[0].mxu0
    %v932 = vadd.f32 %v240, %v931
    %v933 = vpop.f32.mrb[0].mxu0
    %v934 = vadd.f32 %v244, %v933
    %v935 = vpop.f32.mrb[0].mxu0
    %v936 = vadd.f32 %v240, %v935
    %v937 = vpop.f32.mrb[0].mxu0
    %v938 = vadd.f32 %v244, %v937
    %939 = vdwg.mxu0
    %940 = vmatprep.subr.bf16.mxu0 %v706
    %941 = vmatpush1.bf16.msra.mxu0 %v705
    %942 = vmatprep.subr.bf16.mxu0 %v710
    %943 = vmatpush1.bf16.msra.mxu0 %v709
    %944 = vmatprep.subr.bf16.mxu0 %v714
    %945 = vmatpush1.bf16.msra.mxu0 %v713
    %946 = vmatprep.subr.bf16.mxu0 %v718
    %947 = vmatpush1.bf16.msra.mxu0 %v717
    %948 = vmatprep.subr.bf16.mxu0 %v722
    %949 = vmatpush1.bf16.msra.mxu0 %v721
    %950 = vmatprep.subr.bf16.mxu0 %v726
    %951 = vmatpush1.bf16.msra.mxu0 %v725
    %952 = vmatprep.subr.bf16.mxu0 %v730
    %953 = vmatpush1.bf16.msra.mxu0 %v729
    %954 = vmatprep.subr.bf16.mxu0 %v734
    %955 = vmatpush1.bf16.msra.mxu0 %v733
    %956 = vmatprep.subr.bf16.mxu0 %v738
    %957 = vmatpush1.bf16.msra.mxu0 %v737
    %958 = vmatprep.subr.bf16.mxu0 %v742
    %959 = vmatpush1.bf16.msra.mxu0 %v741
    %960 = vmatprep.subr.bf16.mxu0 %v746
    %961 = vmatpush1.bf16.msra.mxu0 %v745
    %962 = vmatprep.subr.bf16.mxu0 %v750
    %963 = vmatpush1.bf16.msra.mxu0 %v749
    %964 = vmatprep.subr.bf16.mxu0 %v754
    %965 = vmatpush1.bf16.msra.mxu0 %v753
    %966 = vmatprep.subr.bf16.mxu0 %v758
    %967 = vmatpush1.bf16.msra.mxu0 %v757
    %968 = vmatprep.subr.bf16.mxu0 %v762
    %969 = vmatpush1.bf16.msra.mxu0 %v761
    %970 = vmatprep.subr.bf16.mxu0 %v766
    %971 = vmatpush1.bf16.msra.mxu0 %v765
    %972 = vmatprep.mubr.bf16.mxu0 %v235
    %973 = vmatmul.mubr.bf16.gmra.mrb[0].mxu0 %v234
    %v974 = vpop.f32.mrb[0].mxu0
    %v975 = vadd.f32 %v932, %v974
    %v976 = vpop.f32.mrb[0].mxu0
    %v977 = vadd.f32 %v934, %v976
    %v978 = vpop.f32.mrb[0].mxu0
    %v979 = vadd.f32 %v936, %v978
    %v980 = vpop.f32.mrb[0].mxu0
    %v981 = vadd.f32 %v938, %v980
    %982 = vdwg.mxu0
    %983 = vmatprep.subr.bf16.mxu0 %v644
    %984 = vmatpush1.bf16.msra.mxu0 %v643
    %985 = vmatprep.subr.bf16.mxu0 %v648
    %986 = vmatpush1.bf16.msra.mxu0 %v647
    %987 = vmatprep.subr.bf16.mxu0 %v652
    %988 = vmatpush1.bf16.msra.mxu0 %v651
    %989 = vmatprep.subr.bf16.mxu0 %v656
    %990 = vmatpush1.bf16.msra.mxu0 %v655
    %991 = vmatprep.subr.bf16.mxu0 %v660
    %992 = vmatpush1.bf16.msra.mxu0 %v659
    %993 = vmatprep.subr.bf16.mxu0 %v664
    %994 = vmatpush1.bf16.msra.mxu0 %v663
    %995 = vmatprep.subr.bf16.mxu0 %v668
    %996 = vmatpush1.bf16.msra.mxu0 %v667
    %997 = vmatprep.subr.bf16.mxu0 %v672
    %998 = vmatpush1.bf16.msra.mxu0 %v671
    %999 = vmatprep.subr.bf16.mxu0 %v676
    %1000 = vmatpush1.bf16.msra.mxu0 %v675
    %1001 = vmatprep.subr.bf16.mxu0 %v680
    %1002 = vmatpush1.bf16.msra.mxu0 %v679
    %1003 = vmatprep.subr.bf16.mxu0 %v684
    %1004 = vmatpush1.bf16.msra.mxu0 %v683
    %1005 = vmatprep.subr.bf16.mxu0 %v688
    %1006 = vmatpush1.bf16.msra.mxu0 %v687
    %1007 = vmatprep.subr.bf16.mxu0 %v692
    %1008 = vmatpush1.bf16.msra.mxu0 %v691
    %1009 = vmatprep.subr.bf16.mxu0 %v696
    %1010 = vmatpush1.bf16.msra.mxu0 %v695
    %1011 = vmatprep.subr.bf16.mxu0 %v700
    %1012 = vmatpush1.bf16.msra.mxu0 %v699
    %1013 = vmatprep.subr.bf16.mxu0 %v704
    %1014 = vmatpush1.bf16.msra.mxu0 %v703
    %1015 = vmatprep.mubr.bf16.mxu0 %v233
    %1016 = vmatmul.mubr.bf16.gmra.mrb[0].mxu0 %v232
    %v1017 = vpop.f32.mrb[0].mxu0
    %v1018 = vadd.f32 %v248, %v1017
    %v1019 = vpop.f32.mrb[0].mxu0
    %v1020 = vadd.f32 %v252, %v1019
    %v1021 = vpop.f32.mrb[0].mxu0
    %v1022 = vadd.f32 %v248, %v1021
    %v1023 = vpop.f32.mrb[0].mxu0
    %v1024 = vadd.f32 %v252, %v1023
    %1025 = vdwg.mxu0
    %1026 = vmatprep.subr.bf16.mxu0 %v708
    %1027 = vmatpush1.bf16.msra.mxu0 %v707
    %1028 = vmatprep.subr.bf16.mxu0 %v712
    %1029 = vmatpush1.bf16.msra.mxu0 %v711
    %1030 = vmatprep.subr.bf16.mxu0 %v716
    %1031 = vmatpush1.bf16.msra.mxu0 %v715
    %1032 = vmatprep.subr.bf16.mxu0 %v720
    %1033 = vmatpush1.bf16.msra.mxu0 %v719
    %1034 = vmatprep.subr.bf16.mxu0 %v724
    %1035 = vmatpush1.bf16.msra.mxu0 %v723
    %1036 = vmatprep.subr.bf16.mxu0 %v728
    %1037 = vmatpush1.bf16.msra.mxu0 %v727
    %1038 = vmatprep.subr.bf16.mxu0 %v732
    %1039 = vmatpush1.bf16.msra.mxu0 %v731
    %1040 = vmatprep.subr.bf16.mxu0 %v736
    %1041 = vmatpush1.bf16.msra.mxu0 %v735
    %1042 = vmatprep.subr.bf16.mxu0 %v740
    %1043 = vmatpush1.bf16.msra.mxu0 %v739
    %1044 = vmatprep.subr.bf16.mxu0 %v744
    %1045 = vmatpush1.bf16.msra.mxu0 %v743
    %1046 = vmatprep.subr.bf16.mxu0 %v748
    %1047 = vmatpush1.bf16.msra.mxu0 %v747
    %1048 = vmatprep.subr.bf16.mxu0 %v752
    %1049 = vmatpush1.bf16.msra.mxu0 %v751
    %1050 = vmatprep.subr.bf16.mxu0 %v756
    %1051 = vmatpush1.bf16.msra.mxu0 %v755
    %1052 = vmatprep.subr.bf16.mxu0 %v760
    %1053 = vmatpush1.bf16.msra.mxu0 %v759
    %1054 = vmatprep.subr.bf16.mxu0 %v764
    %1055 = vmatpush1.bf16.msra.mxu0 %v763
    %1056 = vmatprep.subr.bf16.mxu0 %v768
    %1057 = vmatpush1.bf16.msra.mxu0 %v767
    %1058 = vmatprep.mubr.bf16.mxu0 %v235
    %1059 = vmatmul.mubr.bf16.gmra.mrb[0].mxu0 %v234
    %v1060 = vpop.f32.mrb[0].mxu0
    %v1061 = vadd.f32 %v1018, %v1060
    %v1062 = vpop.f32.mrb[0].mxu0
    %v1063 = vadd.f32 %v1020, %v1062
    %v1064 = vpop.f32.mrb[0].mxu0
    %v1065 = vadd.f32 %v1022, %v1064
    %v1066 = vpop.f32.mrb[0].mxu0
    %v1067 = vadd.f32 %v1024, %v1066
    %1068 = vdwg.mxu0
    %v1069 = vmax.f32 %v975, 0.0
    %v1070 = vmax.f32 %v977, 0.0
    %v1071 = vmax.f32 %v1061, 0.0
    %v1072 = vmax.f32 %v1063, 0.0
    %v1073 = vmax.f32 %v979, 0.0
    %v1074 = vmax.f32 %v981, 0.0
    %v1075 = vmax.f32 %v1065, 0.0
    %v1076 = vmax.f32 %v1067, 0.0
    %v1077 = vpack.c.bf16 %v1073, %v1069
    %v1078 = vpack.c.bf16 %v1074, %v1070
    %v1079 = vpack.c.bf16 %v1075, %v1071
    %v1080 = vpack.c.bf16 %v1076, %v1072
    %1081 = vmatprep.subr.bf16.mxu0 %v642
    %1082 = vmatpush1.bf16.msra.mxu0 %v641
    %1083 = vmatprep.subr.bf16.mxu0 %v646
    %1084 = vmatpush1.bf16.msra.mxu0 %v645
    %1085 = vmatprep.subr.bf16.mxu0 %v650
    %1086 = vmatpush1.bf16.msra.mxu0 %v649
    %1087 = vmatprep.subr.bf16.mxu0 %v654
    %1088 = vmatpush1.bf16.msra.mxu0 %v653
    %1089 = vmatprep.subr.bf16.mxu0 %v658
    %1090 = vmatpush1.bf16.msra.mxu0 %v657
    %1091 = vmatprep.subr.bf16.mxu0 %v662
    %1092 = vmatpush1.bf16.msra.mxu0 %v661
    %1093 = vmatprep.subr.bf16.mxu0 %v666
    %1094 = vmatpush1.bf16.msra.mxu0 %v665
    %1095 = vmatprep.subr.bf16.mxu0 %v670
    %1096 = vmatpush1.bf16.msra.mxu0 %v669
    %1097 = vmatprep.subr.bf16.mxu0 %v674
    %1098 = vmatpush1.bf16.msra.mxu0 %v673
    %1099 = vmatprep.subr.bf16.mxu0 %v678
    %1100 = vmatpush1.bf16.msra.mxu0 %v677
    %1101 = vmatprep.subr.bf16.mxu0 %v682
    %1102 = vmatpush1.bf16.msra.mxu0 %v681
    %1103 = vmatprep.subr.bf16.mxu0 %v686
    %1104 = vmatpush1.bf16.msra.mxu0 %v685
    %1105 = vmatprep.subr.bf16.mxu0 %v690
    %1106 = vmatpush1.bf16.msra.mxu0 %v689
    %1107 = vmatprep.subr.bf16.mxu0 %v694
    %1108 = vmatpush1.bf16.msra.mxu0 %v693
    %1109 = vmatprep.subr.bf16.mxu0 %v698
    %1110 = vmatpush1.bf16.msra.mxu0 %v697
    %1111 = vmatprep.subr.bf16.mxu0 %v702
    %1112 = vmatpush1.bf16.msra.mxu0 %v701
    %1113 = vmatprep.mubr.bf16.mxu0 %v1078
    %1114 = vmatmul.mubr.bf16.gmra.mrb[0].mxu0 %v1077
    %v1115 = vpop.f32.mrb[0].mxu0
    %v1116 = vadd.f32 %v240, %v1115
    %v1117 = vpop.f32.mrb[0].mxu0
    %v1118 = vadd.f32 %v244, %v1117
    %v1119 = vpop.f32.mrb[0].mxu0
    %v1120 = vadd.f32 %v240, %v1119
    %v1121 = vpop.f32.mrb[0].mxu0
    %v1122 = vadd.f32 %v244, %v1121
    %1123 = vdwg.mxu0
    %1124 = vmatprep.subr.bf16.mxu0 %v706
    %1125 = vmatpush1.bf16.msra.mxu0 %v705
    %1126 = vmatprep.subr.bf16.mxu0 %v710
    %1127 = vmatpush1.bf16.msra.mxu0 %v709
    %1128 = vmatprep.subr.bf16.mxu0 %v714
    %1129 = vmatpush1.bf16.msra.mxu0 %v713
    %1130 = vmatprep.subr.bf16.mxu0 %v718
    %1131 = vmatpush1.bf16.msra.mxu0 %v717
    %1132 = vmatprep.subr.bf16.mxu0 %v722
    %1133 = vmatpush1.bf16.msra.mxu0 %v721
    %1134 = vmatprep.subr.bf16.mxu0 %v726
    %1135 = vmatpush1.bf16.msra.mxu0 %v725
    %1136 = vmatprep.subr.bf16.mxu0 %v730
    %1137 = vmatpush1.bf16.msra.mxu0 %v729
    %1138 = vmatprep.subr.bf16.mxu0 %v734
    %1139 = vmatpush1.bf16.msra.mxu0 %v733
    %1140 = vmatprep.subr.bf16.mxu0 %v738
    %1141 = vmatpush1.bf16.msra.mxu0 %v737
    %1142 = vmatprep.subr.bf16.mxu0 %v742
    %1143 = vmatpush1.bf16.msra.mxu0 %v741
    %1144 = vmatprep.subr.bf16.mxu0 %v746
    %1145 = vmatpush1.bf16.msra.mxu0 %v745
    %1146 = vmatprep.subr.bf16.mxu0 %v750
    %1147 = vmatpush1.bf16.msra.mxu0 %v749
    %1148 = vmatprep.subr.bf16.mxu0 %v754
    %1149 = vmatpush1.bf16.msra.mxu0 %v753
    %1150 = vmatprep.subr.bf16.mxu0 %v758
    %1151 = vmatpush1.bf16.msra.mxu0 %v757
    %1152 = vmatprep.subr.bf16.mxu0 %v762
    %1153 = vmatpush1.bf16.msra.mxu0 %v761
    %1154 = vmatprep.subr.bf16.mxu0 %v766
    %1155 = vmatpush1.bf16.msra.mxu0 %v765
    %1156 = vmatprep.mubr.bf16.mxu0 %v1080
    %1157 = vmatmul.mubr.bf16.gmra.mrb[0].mxu0 %v1079
    %v1158 = vpop.f32.mrb[0].mxu0
    %v1159 = vadd.f32 %v1116, %v1158
    %v1160 = vpop.f32.mrb[0].mxu0
    %v1161 = vadd.f32 %v1118, %v1160
    %v1162 = vpop.f32.mrb[0].mxu0
    %v1163 = vadd.f32 %v1120, %v1162
    %v1164 = vpop.f32.mrb[0].mxu0
    %v1165 = vadd.f32 %v1122, %v1164
    %1166 = vdwg.mxu0
    %1167 = vmatprep.subr.bf16.mxu0 %v644
    %1168 = vmatpush1.bf16.msra.mxu0 %v643
    %1169 = vmatprep.subr.bf16.mxu0 %v648
    %1170 = vmatpush1.bf16.msra.mxu0 %v647
    %1171 = vmatprep.subr.bf16.mxu0 %v652
    %1172 = vmatpush1.bf16.msra.mxu0 %v651
    %1173 = vmatprep.subr.bf16.mxu0 %v656
    %1174 = vmatpush1.bf16.msra.mxu0 %v655
    %1175 = vmatprep.subr.bf16.mxu0 %v660
    %1176 = vmatpush1.bf16.msra.mxu0 %v659
    %1177 = vmatprep.subr.bf16.mxu0 %v664
    %1178 = vmatpush1.bf16.msra.mxu0 %v663
    %1179 = vmatprep.subr.bf16.mxu0 %v668
    %1180 = vmatpush1.bf16.msra.mxu0 %v667
    %1181 = vmatprep.subr.bf16.mxu0 %v672
    %1182 = vmatpush1.bf16.msra.mxu0 %v671
    %1183 = vmatprep.subr.bf16.mxu0 %v676
    %1184 = vmatpush1.bf16.msra.mxu0 %v675
    %1185 = vmatprep.subr.bf16.mxu0 %v680
    %1186 = vmatpush1.bf16.msra.mxu0 %v679
    %1187 = vmatprep.subr.bf16.mxu0 %v684
    %1188 = vmatpush1.bf16.msra.mxu0 %v683
    %1189 = vmatprep.subr.bf16.mxu0 %v688
    %1190 = vmatpush1.bf16.msra.mxu0 %v687
    %1191 = vmatprep.subr.bf16.mxu0 %v692
    %1192 = vmatpush1.bf16.msra.mxu0 %v691
    %1193 = vmatprep.subr.bf16.mxu0 %v696
    %1194 = vmatpush1.bf16.msra.mxu0 %v695
    %1195 = vmatprep.subr.bf16.mxu0 %v700
    %1196 = vmatpush1.bf16.msra.mxu0 %v699
    %1197 = vmatprep.subr.bf16.mxu0 %v704
    %1198 = vmatpush1.bf16.msra.mxu0 %v703
    %1199 = vmatprep.mubr.bf16.mxu0 %v1078
    %1200 = vmatmul.mubr.bf16.gmra.mrb[0].mxu0 %v1077
    %v1201 = vpop.f32.mrb[0].mxu0
    %v1202 = vadd.f32 %v248, %v1201
    %v1203 = vpop.f32.mrb[0].mxu0
    %v1204 = vadd.f32 %v252, %v1203
    %v1205 = vpop.f32.mrb[0].mxu0
    %v1206 = vadd.f32 %v248, %v1205
    %v1207 = vpop.f32.mrb[0].mxu0
    %v1208 = vadd.f32 %v252, %v1207
    %1209 = vdwg.mxu0
    %1210 = vmatprep.subr.bf16.mxu0 %v708
    %1211 = vmatpush1.bf16.msra.mxu0 %v707
    %1212 = vmatprep.subr.bf16.mxu0 %v712
    %1213 = vmatpush1.bf16.msra.mxu0 %v711
    %1214 = vmatprep.subr.bf16.mxu0 %v716
    %1215 = vmatpush1.bf16.msra.mxu0 %v715
    %1216 = vmatprep.subr.bf16.mxu0 %v720
    %1217 = vmatpush1.bf16.msra.mxu0 %v719
    %1218 = vmatprep.subr.bf16.mxu0 %v724
    %1219 = vmatpush1.bf16.msra.mxu0 %v723
    %1220 = vmatprep.subr.bf16.mxu0 %v728
    %1221 = vmatpush1.bf16.msra.mxu0 %v727
    %1222 = vmatprep.subr.bf16.mxu0 %v732
    %1223 = vmatpush1.bf16.msra.mxu0 %v731
    %1224 = vmatprep.subr.bf16.mxu0 %v736
    %1225 = vmatpush1.bf16.msra.mxu0 %v735
    %1226 = vmatprep.subr.bf16.mxu0 %v740
    %1227 = vmatpush1.bf16.msra.mxu0 %v739
    %1228 = vmatprep.subr.bf16.mxu0 %v744
    %1229 = vmatpush1.bf16.msra.mxu0 %v743
    %1230 = vmatprep.subr.bf16.mxu0 %v748
    %1231 = vmatpush1.bf16.msra.mxu0 %v747
    %1232 = vmatprep.subr.bf16.mxu0 %v752
    %1233 = vmatpush1.bf16.msra.mxu0 %v751
    %1234 = vmatprep.subr.bf16.mxu0 %v756
    %1235 = vmatpush1.bf16.msra.mxu0 %v755
    %1236 = vmatprep.subr.bf16.mxu0 %v760
    %1237 = vmatpush1.bf16.msra.mxu0 %v759
    %1238 = vmatprep.subr.bf16.mxu0 %v764
    %1239 = vmatpush1.bf16.msra.mxu0 %v763
    %1240 = vmatprep.subr.bf16.mxu0 %v768
    %1241 = vmatpush1.bf16.msra.mxu0 %v767
    %1242 = vmatprep.mubr.bf16.mxu0 %v1080
    %1243 = vmatmul.mubr.bf16.gmra.mrb[0].mxu0 %v1079
    %v1244 = vpop.f32.mrb[0].mxu0
    %v1245 = vadd.f32 %v1202, %v1244
    %v1246 = vpop.f32.mrb[0].mxu0
    %v1247 = vadd.f32 %v1204, %v1246
    %v1248 = vpop.f32.mrb[0].mxu0
    %v1249 = vadd.f32 %v1206, %v1248
    %v1250 = vpop.f32.mrb[0].mxu0
    %v1251 = vadd.f32 %v1208, %v1250
    %1252 = vdwg.mxu0
    %v1253 = vmax.f32 %v1159, 0.0
    %v1254 = vmax.f32 %v1161, 0.0
    %v1255 = vmax.f32 %v1245, 0.0
    %v1256 = vmax.f32 %v1247, 0.0
    %v1257 = vmax.f32 %v1163, 0.0
    %v1258 = vmax.f32 %v1165, 0.0
    %v1259 = vmax.f32 %v1249, 0.0
    %v1260 = vmax.f32 %v1251, 0.0
    %v1261 = vpack.c.bf16 %v1257, %v1253
    %v1262 = vpack.c.bf16 %v1258, %v1254
    %v1263 = vpack.c.bf16 %v1259, %v1255
    %v1264 = vpack.c.bf16 %v1260, %v1256
    %1265 = vmatprep.subr.bf16.mxu0 %v642
    %1266 = vmatpush1.bf16.msra.mxu0 %v641
    %1267 = vmatprep.subr.bf16.mxu0 %v646
    %1268 = vmatpush1.bf16.msra.mxu0 %v645
    %1269 = vmatprep.subr.bf16.mxu0 %v650
    %1270 = vmatpush1.bf16.msra.mxu0 %v649
    %1271 = vmatprep.subr.bf16.mxu0 %v654
    %1272 = vmatpush1.bf16.msra.mxu0 %v653
    %1273 = vmatprep.subr.bf16.mxu0 %v658
    %1274 = vmatpush1.bf16.msra.mxu0 %v657
    %1275 = vmatprep.subr.bf16.mxu0 %v662
    %1276 = vmatpush1.bf16.msra.mxu0 %v661
    %1277 = vmatprep.subr.bf16.mxu0 %v666
    %1278 = vmatpush1.bf16.msra.mxu0 %v665
    %1279 = vmatprep.subr.bf16.mxu0 %v670
    %1280 = vmatpush1.bf16.msra.mxu0 %v669
    %1281 = vmatprep.subr.bf16.mxu0 %v674
    %1282 = vmatpush1.bf16.msra.mxu0 %v673
    %1283 = vmatprep.subr.bf16.mxu0 %v678
    %1284 = vmatpush1.bf16.msra.mxu0 %v677
    %1285 = vmatprep.subr.bf16.mxu0 %v682
    %1286 = vmatpush1.bf16.msra.mxu0 %v681
    %1287 = vmatprep.subr.bf16.mxu0 %v686
    %1288 = vmatpush1.bf16.msra.mxu0 %v685
    %1289 = vmatprep.subr.bf16.mxu0 %v690
    %1290 = vmatpush1.bf16.msra.mxu0 %v689
    %1291 = vmatprep.subr.bf16.mxu0 %v694
    %1292 = vmatpush1.bf16.msra.mxu0 %v693
    %1293 = vmatprep.subr.bf16.mxu0 %v698
    %1294 = vmatpush1.bf16.msra.mxu0 %v697
    %1295 = vmatprep.subr.bf16.mxu0 %v702
    %1296 = vmatpush1.bf16.msra.mxu0 %v701
    %1297 = vmatprep.mubr.bf16.mxu0 %v1262
    %1298 = vmatmul.mubr.bf16.gmra.mrb[0].mxu0 %v1261
    %v1299 = vpop.f32.mrb[0].mxu0
    %v1300 = vadd.f32 %v240, %v1299
    %v1301 = vpop.f32.mrb[0].mxu0
    %v1302 = vadd.f32 %v244, %v1301
    %v1303 = vpop.f32.mrb[0].mxu0
    %v1304 = vadd.f32 %v240, %v1303
    %v1305 = vpop.f32.mrb[0].mxu0
    %v1306 = vadd.f32 %v244, %v1305
    %1307 = vdwg.mxu0
    %1308 = vmatprep.subr.bf16.mxu0 %v706
    %1309 = vmatpush1.bf16.msra.mxu0 %v705
    %1310 = vmatprep.subr.bf16.mxu0 %v710
    %1311 = vmatpush1.bf16.msra.mxu0 %v709
    %1312 = vmatprep.subr.bf16.mxu0 %v714
    %1313 = vmatpush1.bf16.msra.mxu0 %v713
    %1314 = vmatprep.subr.bf16.mxu0 %v718
    %1315 = vmatpush1.bf16.msra.mxu0 %v717
    %1316 = vmatprep.subr.bf16.mxu0 %v722
    %1317 = vmatpush1.bf16.msra.mxu0 %v721
    %1318 = vmatprep.subr.bf16.mxu0 %v726
    %1319 = vmatpush1.bf16.msra.mxu0 %v725
    %1320 = vmatprep.subr.bf16.mxu0 %v730
    %1321 = vmatpush1.bf16.msra.mxu0 %v729
    %1322 = vmatprep.subr.bf16.mxu0 %v734
    %1323 = vmatpush1.bf16.msra.mxu0 %v733
    %1324 = vmatprep.subr.bf16.mxu0 %v738
    %1325 = vmatpush1.bf16.msra.mxu0 %v737
    %1326 = vmatprep.subr.bf16.mxu0 %v742
    %1327 = vmatpush1.bf16.msra.mxu0 %v741
    %1328 = vmatprep.subr.bf16.mxu0 %v746
    %1329 = vmatpush1.bf16.msra.mxu0 %v745
    %1330 = vmatprep.subr.bf16.mxu0 %v750
    %1331 = vmatpush1.bf16.msra.mxu0 %v749
    %1332 = vmatprep.subr.bf16.mxu0 %v754
    %1333 = vmatpush1.bf16.msra.mxu0 %v753
    %1334 = vmatprep.subr.bf16.mxu0 %v758
    %1335 = vmatpush1.bf16.msra.mxu0 %v757
    %1336 = vmatprep.subr.bf16.mxu0 %v762
    %1337 = vmatpush1.bf16.msra.mxu0 %v761
    %1338 = vmatprep.subr.bf16.mxu0 %v766
    %1339 = vmatpush1.bf16.msra.mxu0 %v765
    %1340 = vmatprep.mubr.bf16.mxu0 %v1264
    %1341 = vmatmul.mubr.bf16.gmra.mrb[0].mxu0 %v1263
    %v1342 = vpop.f32.mrb[0].mxu0
    %v1343 = vadd.f32 %v1300, %v1342
    %v1344 = vpop.f32.mrb[0].mxu0
    %v1345 = vadd.f32 %v1302, %v1344
    %v1346 = vpop.f32.mrb[0].mxu0
    %v1347 = vadd.f32 %v1304, %v1346
    %v1348 = vpop.f32.mrb[0].mxu0
    %v1349 = vadd.f32 %v1306, %v1348
    %1350 = vdwg.mxu0
    %1351 = vmatprep.subr.bf16.mxu0 %v644
    %1352 = vmatpush1.bf16.msra.mxu0 %v643
    %1353 = vmatprep.subr.bf16.mxu0 %v648
    %1354 = vmatpush1.bf16.msra.mxu0 %v647
    %1355 = vmatprep.subr.bf16.mxu0 %v652
    %1356 = vmatpush1.bf16.msra.mxu0 %v651
    %1357 = vmatprep.subr.bf16.mxu0 %v656
    %1358 = vmatpush1.bf16.msra.mxu0 %v655
    %1359 = vmatprep.subr.bf16.mxu0 %v660
    %1360 = vmatpush1.bf16.msra.mxu0 %v659
    %1361 = vmatprep.subr.bf16.mxu0 %v664
    %1362 = vmatpush1.bf16.msra.mxu0 %v663
    %1363 = vmatprep.subr.bf16.mxu0 %v668
    %1364 = vmatpush1.bf16.msra.mxu0 %v667
    %1365 = vmatprep.subr.bf16.mxu0 %v672
    %1366 = vmatpush1.bf16.msra.mxu0 %v671
    %1367 = vmatprep.subr.bf16.mxu0 %v676
    %1368 = vmatpush1.bf16.msra.mxu0 %v675
    %1369 = vmatprep.subr.bf16.mxu0 %v680
    %1370 = vmatpush1.bf16.msra.mxu0 %v679
    %1371 = vmatprep.subr.bf16.mxu0 %v684
    %1372 = vmatpush1.bf16.msra.mxu0 %v683
    %1373 = vmatprep.subr.bf16.mxu0 %v688
    %1374 = vmatpush1.bf16.msra.mxu0 %v687
    %1375 = vmatprep.subr.bf16.mxu0 %v692
    %1376 = vmatpush1.bf16.msra.mxu0 %v691
    %1377 = vmatprep.subr.bf16.mxu0 %v696
    %1378 = vmatpush1.bf16.msra.mxu0 %v695
    %1379 = vmatprep.subr.bf16.mxu0 %v700
    %1380 = vmatpush1.bf16.msra.mxu0 %v699
    %1381 = vmatprep.subr.bf16.mxu0 %v704
    %1382 = vmatpush1.bf16.msra.mxu0 %v703
    %1383 = vmatprep.mubr.bf16.mxu0 %v1262
    %1384 = vmatmul.mubr.bf16.gmra.mrb[0].mxu0 %v1261
    %v1385 = vpop.f32.mrb[0].mxu0
    %v1386 = vadd.f32 %v248, %v1385
    %v1387 = vpop.f32.mrb[0].mxu0
    %v1388 = vadd.f32 %v252, %v1387
    %v1389 = vpop.f32.mrb[0].mxu0
    %v1390 = vadd.f32 %v248, %v1389
    %v1391 = vpop.f32.mrb[0].mxu0
    %v1392 = vadd.f32 %v252, %v1391
    %1393 = vdwg.mxu0
    %1394 = vmatprep.subr.bf16.mxu0 %v708
    %1395 = vmatpush1.bf16.msra.mxu0 %v707
    %1396 = vmatprep.subr.bf16.mxu0 %v712
    %1397 = vmatpush1.bf16.msra.mxu0 %v711
    %1398 = vmatprep.subr.bf16.mxu0 %v716
    %1399 = vmatpush1.bf16.msra.mxu0 %v715
    %1400 = vmatprep.subr.bf16.mxu0 %v720
    %1401 = vmatpush1.bf16.msra.mxu0 %v719
    %1402 = vmatprep.subr.bf16.mxu0 %v724
    %1403 = vmatpush1.bf16.msra.mxu0 %v723
    %1404 = vmatprep.subr.bf16.mxu0 %v728
    %1405 = vmatpush1.bf16.msra.mxu0 %v727
    %1406 = vmatprep.subr.bf16.mxu0 %v732
    %1407 = vmatpush1.bf16.msra.mxu0 %v731
    %1408 = vmatprep.subr.bf16.mxu0 %v736
    %1409 = vmatpush1.bf16.msra.mxu0 %v735
    %1410 = vmatprep.subr.bf16.mxu0 %v740
    %1411 = vmatpush1.bf16.msra.mxu0 %v739
    %1412 = vmatprep.subr.bf16.mxu0 %v744
    %1413 = vmatpush1.bf16.msra.mxu0 %v743
    %1414 = vmatprep.subr.bf16.mxu0 %v748
    %1415 = vmatpush1.bf16.msra.mxu0 %v747
    %1416 = vmatprep.subr.bf16.mxu0 %v752
    %1417 = vmatpush1.bf16.msra.mxu0 %v751
    %1418 = vmatprep.subr.bf16.mxu0 %v756
    %1419 = vmatpush1.bf16.msra.mxu0 %v755
    %1420 = vmatprep.subr.bf16.mxu0 %v760
    %1421 = vmatpush1.bf16.msra.mxu0 %v759
    %1422 = vmatprep.subr.bf16.mxu0 %v764
    %1423 = vmatpush1.bf16.msra.mxu0 %v763
    %1424 = vmatprep.subr.bf16.mxu0 %v768
    %1425 = vmatpush1.bf16.msra.mxu0 %v767
    %1426 = vmatprep.mubr.bf16.mxu0 %v1264
    %1427 = vmatmul.mubr.bf16.gmra.mrb[0].mxu0 %v1263
    %v1428 = vpop.f32.mrb[0].mxu0
    %v1429 = vadd.f32 %v1386, %v1428
    %v1430 = vpop.f32.mrb[0].mxu0
    %v1431 = vadd.f32 %v1388, %v1430
    %v1432 = vpop.f32.mrb[0].mxu0
    %v1433 = vadd.f32 %v1390, %v1432
    %v1434 = vpop.f32.mrb[0].mxu0
    %v1435 = vadd.f32 %v1392, %v1434
    %1436 = vdwg.mxu0
    %v1437 = vmax.f32 %v1343, 0.0
    %v1438 = vmax.f32 %v1345, 0.0
    %v1439 = vmax.f32 %v1429, 0.0
    %v1440 = vmax.f32 %v1431, 0.0
    %v1441 = vmax.f32 %v1347, 0.0
    %v1442 = vmax.f32 %v1349, 0.0
    %v1443 = vmax.f32 %v1433, 0.0
    %v1444 = vmax.f32 %v1435, 0.0
    %v1445 = vpack.c.bf16 %v1441, %v1437
    %v1446 = vpack.c.bf16 %v1442, %v1438
    %v1447 = vpack.c.bf16 %v1443, %v1439
    %v1448 = vpack.c.bf16 %v1444, %v1440
    %v1449 = vld [vmem:[#allocation5] sm:$0xff]
    %v1450 = vld [vmem:[#allocation5 + $0x8] sm:$0xff]
    %v1451 = vld [vmem:[#allocation5 + $0x10] sm:$0xff]
    %v1452 = vld [vmem:[#allocation5 + $0x18] sm:$0xff]
    %v1453 = vld [vmem:[#allocation5 + $0x20] sm:$0xff]
    %v1454 = vld [vmem:[#allocation5 + $0x28] sm:$0xff]
    %v1455 = vld [vmem:[#allocation5 + $0x30] sm:$0xff]
    %v1456 = vld [vmem:[#allocation5 + $0x38] sm:$0xff]
    %v1457 = vpack.c.bf16 %v1453, %v1449
    %v1458 = vpack.c.bf16 %v1454, %v1450
    %v1459 = vpack.c.bf16 %v1455, %v1451
    %v1460 = vpack.c.bf16 %v1456, %v1452
    %v1461 = vld [vmem:[#allocation8] sm:$0xff]
    %v1462 = vld [vmem:[#allocation8 + $0x8] sm:$0xff]
    %v1463 = vld [vmem:[#allocation8 + $0x10] sm:$0xff]
    %v1464 = vld [vmem:[#allocation8 + $0x18] sm:$0xff]
    %v1465 = vld [vmem:[#allocation8 + $0x20] sm:$0xff]
    %v1466 = vld [vmem:[#allocation8 + $0x28] sm:$0xff]
    %v1467 = vld [vmem:[#allocation8 + $0x30] sm:$0xff]
    %v1468 = vld [vmem:[#allocation8 + $0x38] sm:$0xff]
    %v1469 = vld [vmem:[#allocation8 + $0x40] sm:$0xff]
    %v1470 = vld [vmem:[#allocation8 + $0x48] sm:$0xff]
    %v1471 = vld [vmem:[#allocation8 + $0x50] sm:$0xff]
    %v1472 = vld [vmem:[#allocation8 + $0x58] sm:$0xff]
    %v1473 = vld [vmem:[#allocation8 + $0x60] sm:$0xff]
    %v1474 = vld [vmem:[#allocation8 + $0x68] sm:$0xff]
    %v1475 = vld [vmem:[#allocation8 + $0x70] sm:$0xff]
    %v1476 = vld [vmem:[#allocation8 + $0x78] sm:$0xff]
    %v1477 = vld [vmem:[#allocation8 + $0x80] sm:$0xff]
    %v1478 = vld [vmem:[#allocation8 + $0x88] sm:$0xff]
    %v1479 = vld [vmem:[#allocation8 + $0x90] sm:$0xff]
    %v1480 = vld [vmem:[#allocation8 + $0x98] sm:$0xff]
    %v1481 = vld [vmem:[#allocation8 + $0xa0] sm:$0xff]
    %v1482 = vld [vmem:[#allocation8 + $0xa8] sm:$0xff]
    %v1483 = vld [vmem:[#allocation8 + $0xb0] sm:$0xff]
    %v1484 = vld [vmem:[#allocation8 + $0xb8] sm:$0xff]
    %v1485 = vld [vmem:[#allocation8 + $0xc0] sm:$0xff]
    %v1486 = vld [vmem:[#allocation8 + $0xc8] sm:$0xff]
    %v1487 = vld [vmem:[#allocation8 + $0xd0] sm:$0xff]
    %v1488 = vld [vmem:[#allocation8 + $0xd8] sm:$0xff]
    %v1489 = vld [vmem:[#allocation8 + $0xe0] sm:$0xff]
    %v1490 = vld [vmem:[#allocation8 + $0xe8] sm:$0xff]
    %v1491 = vld [vmem:[#allocation8 + $0xf0] sm:$0xff]
    %v1492 = vld [vmem:[#allocation8 + $0xf8] sm:$0xff]
    %v1493 = vld [vmem:[#allocation8 + $0x100] sm:$0xff]
    %v1494 = vld [vmem:[#allocation8 + $0x108] sm:$0xff]
    %v1495 = vld [vmem:[#allocation8 + $0x110] sm:$0xff]
    %v1496 = vld [vmem:[#allocation8 + $0x118] sm:$0xff]
    %v1497 = vld [vmem:[#allocation8 + $0x120] sm:$0xff]
    %v1498 = vld [vmem:[#allocation8 + $0x128] sm:$0xff]
    %v1499 = vld [vmem:[#allocation8 + $0x130] sm:$0xff]
    %v1500 = vld [vmem:[#allocation8 + $0x138] sm:$0xff]
    %v1501 = vld [vmem:[#allocation8 + $0x140] sm:$0xff]
    %v1502 = vld [vmem:[#allocation8 + $0x148] sm:$0xff]
    %v1503 = vld [vmem:[#allocation8 + $0x150] sm:$0xff]
    %v1504 = vld [vmem:[#allocation8 + $0x158] sm:$0xff]
    %v1505 = vld [vmem:[#allocation8 + $0x160] sm:$0xff]
    %v1506 = vld [vmem:[#allocation8 + $0x168] sm:$0xff]
    %v1507 = vld [vmem:[#allocation8 + $0x170] sm:$0xff]
    %v1508 = vld [vmem:[#allocation8 + $0x178] sm:$0xff]
    %v1509 = vld [vmem:[#allocation8 + $0x180] sm:$0xff]
    %v1510 = vld [vmem:[#allocation8 + $0x188] sm:$0xff]
    %v1511 = vld [vmem:[#allocation8 + $0x190] sm:$0xff]
    %v1512 = vld [vmem:[#allocation8 + $0x198] sm:$0xff]
    %v1513 = vld [vmem:[#allocation8 + $0x1a0] sm:$0xff]
    %v1514 = vld [vmem:[#allocation8 + $0x1a8] sm:$0xff]
    %v1515 = vld [vmem:[#allocation8 + $0x1b0] sm:$0xff]
    %v1516 = vld [vmem:[#allocation8 + $0x1b8] sm:$0xff]
    %v1517 = vld [vmem:[#allocation8 + $0x1c0] sm:$0xff]
    %v1518 = vld [vmem:[#allocation8 + $0x1c8] sm:$0xff]
    %v1519 = vld [vmem:[#allocation8 + $0x1d0] sm:$0xff]
    %v1520 = vld [vmem:[#allocation8 + $0x1d8] sm:$0xff]
    %v1521 = vld [vmem:[#allocation8 + $0x1e0] sm:$0xff]
    %v1522 = vld [vmem:[#allocation8 + $0x1e8] sm:$0xff]
    %v1523 = vld [vmem:[#allocation8 + $0x1f0] sm:$0xff]
    %v1524 = vld [vmem:[#allocation8 + $0x1f8] sm:$0xff]
    %v1525 = vld [vmem:[#allocation8 + $0x200] sm:$0xff]
    %v1526 = vld [vmem:[#allocation8 + $0x208] sm:$0xff]
    %v1527 = vld [vmem:[#allocation8 + $0x210] sm:$0xff]
    %v1528 = vld [vmem:[#allocation8 + $0x218] sm:$0xff]
    %v1529 = vld [vmem:[#allocation8 + $0x220] sm:$0xff]
    %v1530 = vld [vmem:[#allocation8 + $0x228] sm:$0xff]
    %v1531 = vld [vmem:[#allocation8 + $0x230] sm:$0xff]
    %v1532 = vld [vmem:[#allocation8 + $0x238] sm:$0xff]
    %v1533 = vld [vmem:[#allocation8 + $0x240] sm:$0xff]
    %v1534 = vld [vmem:[#allocation8 + $0x248] sm:$0xff]
    %v1535 = vld [vmem:[#allocation8 + $0x250] sm:$0xff]
    %v1536 = vld [vmem:[#allocation8 + $0x258] sm:$0xff]
    %v1537 = vld [vmem:[#allocation8 + $0x260] sm:$0xff]
    %v1538 = vld [vmem:[#allocation8 + $0x268] sm:$0xff]
    %v1539 = vld [vmem:[#allocation8 + $0x270] sm:$0xff]
    %v1540 = vld [vmem:[#allocation8 + $0x278] sm:$0xff]
    %v1541 = vld [vmem:[#allocation8 + $0x280] sm:$0xff]
    %v1542 = vld [vmem:[#allocation8 + $0x288] sm:$0xff]
    %v1543 = vld [vmem:[#allocation8 + $0x290] sm:$0xff]
    %v1544 = vld [vmem:[#allocation8 + $0x298] sm:$0xff]
    %v1545 = vld [vmem:[#allocation8 + $0x2a0] sm:$0xff]
    %v1546 = vld [vmem:[#allocation8 + $0x2a8] sm:$0xff]
    %v1547 = vld [vmem:[#allocation8 + $0x2b0] sm:$0xff]
    %v1548 = vld [vmem:[#allocation8 + $0x2b8] sm:$0xff]
    %v1549 = vld [vmem:[#allocation8 + $0x2c0] sm:$0xff]
    %v1550 = vld [vmem:[#allocation8 + $0x2c8] sm:$0xff]
    %v1551 = vld [vmem:[#allocation8 + $0x2d0] sm:$0xff]
    %v1552 = vld [vmem:[#allocation8 + $0x2d8] sm:$0xff]
    %v1553 = vld [vmem:[#allocation8 + $0x2e0] sm:$0xff]
    %v1554 = vld [vmem:[#allocation8 + $0x2e8] sm:$0xff]
    %v1555 = vld [vmem:[#allocation8 + $0x2f0] sm:$0xff]
    %v1556 = vld [vmem:[#allocation8 + $0x2f8] sm:$0xff]
    %v1557 = vld [vmem:[#allocation8 + $0x300] sm:$0xff]
    %v1558 = vld [vmem:[#allocation8 + $0x308] sm:$0xff]
    %v1559 = vld [vmem:[#allocation8 + $0x310] sm:$0xff]
    %v1560 = vld [vmem:[#allocation8 + $0x318] sm:$0xff]
    %v1561 = vld [vmem:[#allocation8 + $0x320] sm:$0xff]
    %v1562 = vld [vmem:[#allocation8 + $0x328] sm:$0xff]
    %v1563 = vld [vmem:[#allocation8 + $0x330] sm:$0xff]
    %v1564 = vld [vmem:[#allocation8 + $0x338] sm:$0xff]
    %v1565 = vld [vmem:[#allocation8 + $0x340] sm:$0xff]
    %v1566 = vld [vmem:[#allocation8 + $0x348] sm:$0xff]
    %v1567 = vld [vmem:[#allocation8 + $0x350] sm:$0xff]
    %v1568 = vld [vmem:[#allocation8 + $0x358] sm:$0xff]
    %v1569 = vld [vmem:[#allocation8 + $0x360] sm:$0xff]
    %v1570 = vld [vmem:[#allocation8 + $0x368] sm:$0xff]
    %v1571 = vld [vmem:[#allocation8 + $0x370] sm:$0xff]
    %v1572 = vld [vmem:[#allocation8 + $0x378] sm:$0xff]
    %v1573 = vld [vmem:[#allocation8 + $0x380] sm:$0xff]
    %v1574 = vld [vmem:[#allocation8 + $0x388] sm:$0xff]
    %v1575 = vld [vmem:[#allocation8 + $0x390] sm:$0xff]
    %v1576 = vld [vmem:[#allocation8 + $0x398] sm:$0xff]
    %v1577 = vld [vmem:[#allocation8 + $0x3a0] sm:$0xff]
    %v1578 = vld [vmem:[#allocation8 + $0x3a8] sm:$0xff]
    %v1579 = vld [vmem:[#allocation8 + $0x3b0] sm:$0xff]
    %v1580 = vld [vmem:[#allocation8 + $0x3b8] sm:$0xff]
    %v1581 = vld [vmem:[#allocation8 + $0x3c0] sm:$0xff]
    %v1582 = vld [vmem:[#allocation8 + $0x3c8] sm:$0xff]
    %v1583 = vld [vmem:[#allocation8 + $0x3d0] sm:$0xff]
    %v1584 = vld [vmem:[#allocation8 + $0x3d8] sm:$0xff]
    %v1585 = vld [vmem:[#allocation8 + $0x3e0] sm:$0xff]
    %v1586 = vld [vmem:[#allocation8 + $0x3e8] sm:$0xff]
    %v1587 = vld [vmem:[#allocation8 + $0x3f0] sm:$0xff]
    %v1588 = vld [vmem:[#allocation8 + $0x3f8] sm:$0xff]
    %v1589 = vld [vmem:[#allocation10] sm:$0xff]
    %v1590 = vld [vmem:[#allocation10 + $0x8] sm:$0xff]
    %v1591 = vld [vmem:[#allocation10 + $0x10] sm:$0xff]
    %v1592 = vld [vmem:[#allocation10 + $0x18] sm:$0xff]
    %v1593 = vld [vmem:[#allocation10 + $0x20] sm:$0xff]
    %v1594 = vld [vmem:[#allocation10 + $0x28] sm:$0xff]
    %v1595 = vld [vmem:[#allocation10 + $0x30] sm:$0xff]
    %v1596 = vld [vmem:[#allocation10 + $0x38] sm:$0xff]
    %v1597 = vld [vmem:[#allocation10 + $0x40] sm:$0xff]
    %v1598 = vld [vmem:[#allocation10 + $0x48] sm:$0xff]
    %v1599 = vld [vmem:[#allocation10 + $0x50] sm:$0xff]
    %v1600 = vld [vmem:[#allocation10 + $0x58] sm:$0xff]
    %v1601 = vld [vmem:[#allocation10 + $0x60] sm:$0xff]
    %v1602 = vld [vmem:[#allocation10 + $0x68] sm:$0xff]
    %v1603 = vld [vmem:[#allocation10 + $0x70] sm:$0xff]
    %v1604 = vld [vmem:[#allocation10 + $0x78] sm:$0xff]
    %v1605 = vld [vmem:[#allocation10 + $0x80] sm:$0xff]
    %v1606 = vld [vmem:[#allocation10 + $0x88] sm:$0xff]
    %v1607 = vld [vmem:[#allocation10 + $0x90] sm:$0xff]
    %v1608 = vld [vmem:[#allocation10 + $0x98] sm:$0xff]
    %v1609 = vld [vmem:[#allocation10 + $0xa0] sm:$0xff]
    %v1610 = vld [vmem:[#allocation10 + $0xa8] sm:$0xff]
    %v1611 = vld [vmem:[#allocation10 + $0xb0] sm:$0xff]
    %v1612 = vld [vmem:[#allocation10 + $0xb8] sm:$0xff]
    %v1613 = vld [vmem:[#allocation10 + $0xc0] sm:$0xff]
    %v1614 = vld [vmem:[#allocation10 + $0xc8] sm:$0xff]
    %v1615 = vld [vmem:[#allocation10 + $0xd0] sm:$0xff]
    %v1616 = vld [vmem:[#allocation10 + $0xd8] sm:$0xff]
    %v1617 = vld [vmem:[#allocation10 + $0xe0] sm:$0xff]
    %v1618 = vld [vmem:[#allocation10 + $0xe8] sm:$0xff]
    %v1619 = vld [vmem:[#allocation10 + $0xf0] sm:$0xff]
    %v1620 = vld [vmem:[#allocation10 + $0xf8] sm:$0xff]
    %v1621 = vld [vmem:[#allocation10 + $0x100] sm:$0xff]
    %v1622 = vld [vmem:[#allocation10 + $0x108] sm:$0xff]
    %v1623 = vld [vmem:[#allocation10 + $0x110] sm:$0xff]
    %v1624 = vld [vmem:[#allocation10 + $0x118] sm:$0xff]
    %v1625 = vld [vmem:[#allocation10 + $0x120] sm:$0xff]
    %v1626 = vld [vmem:[#allocation10 + $0x128] sm:$0xff]
    %v1627 = vld [vmem:[#allocation10 + $0x130] sm:$0xff]
    %v1628 = vld [vmem:[#allocation10 + $0x138] sm:$0xff]
    %v1629 = vld [vmem:[#allocation10 + $0x140] sm:$0xff]
    %v1630 = vld [vmem:[#allocation10 + $0x148] sm:$0xff]
    %v1631 = vld [vmem:[#allocation10 + $0x150] sm:$0xff]
    %v1632 = vld [vmem:[#allocation10 + $0x158] sm:$0xff]
    %v1633 = vld [vmem:[#allocation10 + $0x160] sm:$0xff]
    %v1634 = vld [vmem:[#allocation10 + $0x168] sm:$0xff]
    %v1635 = vld [vmem:[#allocation10 + $0x170] sm:$0xff]
    %v1636 = vld [vmem:[#allocation10 + $0x178] sm:$0xff]
    %v1637 = vld [vmem:[#allocation10 + $0x180] sm:$0xff]
    %v1638 = vld [vmem:[#allocation10 + $0x188] sm:$0xff]
    %v1639 = vld [vmem:[#allocation10 + $0x190] sm:$0xff]
    %v1640 = vld [vmem:[#allocation10 + $0x198] sm:$0xff]
    %v1641 = vld [vmem:[#allocation10 + $0x1a0] sm:$0xff]
    %v1642 = vld [vmem:[#allocation10 + $0x1a8] sm:$0xff]
    %v1643 = vld [vmem:[#allocation10 + $0x1b0] sm:$0xff]
    %v1644 = vld [vmem:[#allocation10 + $0x1b8] sm:$0xff]
    %v1645 = vld [vmem:[#allocation10 + $0x1c0] sm:$0xff]
    %v1646 = vld [vmem:[#allocation10 + $0x1c8] sm:$0xff]
    %v1647 = vld [vmem:[#allocation10 + $0x1d0] sm:$0xff]
    %v1648 = vld [vmem:[#allocation10 + $0x1d8] sm:$0xff]
    %v1649 = vld [vmem:[#allocation10 + $0x1e0] sm:$0xff]
    %v1650 = vld [vmem:[#allocation10 + $0x1e8] sm:$0xff]
    %v1651 = vld [vmem:[#allocation10 + $0x1f0] sm:$0xff]
    %v1652 = vld [vmem:[#allocation10 + $0x1f8] sm:$0xff]
    %v1653 = vld [vmem:[#allocation10 + $0x200] sm:$0xff]
    %v1654 = vld [vmem:[#allocation10 + $0x208] sm:$0xff]
    %v1655 = vld [vmem:[#allocation10 + $0x210] sm:$0xff]
    %v1656 = vld [vmem:[#allocation10 + $0x218] sm:$0xff]
    %v1657 = vld [vmem:[#allocation10 + $0x220] sm:$0xff]
    %v1658 = vld [vmem:[#allocation10 + $0x228] sm:$0xff]
    %v1659 = vld [vmem:[#allocation10 + $0x230] sm:$0xff]
    %v1660 = vld [vmem:[#allocation10 + $0x238] sm:$0xff]
    %v1661 = vld [vmem:[#allocation10 + $0x240] sm:$0xff]
    %v1662 = vld [vmem:[#allocation10 + $0x248] sm:$0xff]
    %v1663 = vld [vmem:[#allocation10 + $0x250] sm:$0xff]
    %v1664 = vld [vmem:[#allocation10 + $0x258] sm:$0xff]
    %v1665 = vld [vmem:[#allocation10 + $0x260] sm:$0xff]
    %v1666 = vld [vmem:[#allocation10 + $0x268] sm:$0xff]
    %v1667 = vld [vmem:[#allocation10 + $0x270] sm:$0xff]
    %v1668 = vld [vmem:[#allocation10 + $0x278] sm:$0xff]
    %v1669 = vld [vmem:[#allocation10 + $0x280] sm:$0xff]
    %v1670 = vld [vmem:[#allocation10 + $0x288] sm:$0xff]
    %v1671 = vld [vmem:[#allocation10 + $0x290] sm:$0xff]
    %v1672 = vld [vmem:[#allocation10 + $0x298] sm:$0xff]
    %v1673 = vld [vmem:[#allocation10 + $0x2a0] sm:$0xff]
    %v1674 = vld [vmem:[#allocation10 + $0x2a8] sm:$0xff]
    %v1675 = vld [vmem:[#allocation10 + $0x2b0] sm:$0xff]
    %v1676 = vld [vmem:[#allocation10 + $0x2b8] sm:$0xff]
    %v1677 = vld [vmem:[#allocation10 + $0x2c0] sm:$0xff]
    %v1678 = vld [vmem:[#allocation10 + $0x2c8] sm:$0xff]
    %v1679 = vld [vmem:[#allocation10 + $0x2d0] sm:$0xff]
    %v1680 = vld [vmem:[#allocation10 + $0x2d8] sm:$0xff]
    %v1681 = vld [vmem:[#allocation10 + $0x2e0] sm:$0xff]
    %v1682 = vld [vmem:[#allocation10 + $0x2e8] sm:$0xff]
    %v1683 = vld [vmem:[#allocation10 + $0x2f0] sm:$0xff]
    %v1684 = vld [vmem:[#allocation10 + $0x2f8] sm:$0xff]
    %v1685 = vld [vmem:[#allocation10 + $0x300] sm:$0xff]
    %v1686 = vld [vmem:[#allocation10 + $0x308] sm:$0xff]
    %v1687 = vld [vmem:[#allocation10 + $0x310] sm:$0xff]
    %v1688 = vld [vmem:[#allocation10 + $0x318] sm:$0xff]
    %v1689 = vld [vmem:[#allocation10 + $0x320] sm:$0xff]
    %v1690 = vld [vmem:[#allocation10 + $0x328] sm:$0xff]
    %v1691 = vld [vmem:[#allocation10 + $0x330] sm:$0xff]
    %v1692 = vld [vmem:[#allocation10 + $0x338] sm:$0xff]
    %v1693 = vld [vmem:[#allocation10 + $0x340] sm:$0xff]
    %v1694 = vld [vmem:[#allocation10 + $0x348] sm:$0xff]
    %v1695 = vld [vmem:[#allocation10 + $0x350] sm:$0xff]
    %v1696 = vld [vmem:[#allocation10 + $0x358] sm:$0xff]
    %v1697 = vld [vmem:[#allocation10 + $0x360] sm:$0xff]
    %v1698 = vld [vmem:[#allocation10 + $0x368] sm:$0xff]
    %v1699 = vld [vmem:[#allocation10 + $0x370] sm:$0xff]
    %v1700 = vld [vmem:[#allocation10 + $0x378] sm:$0xff]
    %v1701 = vld [vmem:[#allocation10 + $0x380] sm:$0xff]
    %v1702 = vld [vmem:[#allocation10 + $0x388] sm:$0xff]
    %v1703 = vld [vmem:[#allocation10 + $0x390] sm:$0xff]
    %v1704 = vld [vmem:[#allocation10 + $0x398] sm:$0xff]
    %v1705 = vld [vmem:[#allocation10 + $0x3a0] sm:$0xff]
    %v1706 = vld [vmem:[#allocation10 + $0x3a8] sm:$0xff]
    %v1707 = vld [vmem:[#allocation10 + $0x3b0] sm:$0xff]
    %v1708 = vld [vmem:[#allocation10 + $0x3b8] sm:$0xff]
    %v1709 = vld [vmem:[#allocation10 + $0x3c0] sm:$0xff]
    %v1710 = vld [vmem:[#allocation10 + $0x3c8] sm:$0xff]
    %v1711 = vld [vmem:[#allocation10 + $0x3d0] sm:$0xff]
    %v1712 = vld [vmem:[#allocation10 + $0x3d8] sm:$0xff]
    %v1713 = vld [vmem:[#allocation10 + $0x3e0] sm:$0xff]
    %v1714 = vld [vmem:[#allocation10 + $0x3e8] sm:$0xff]
    %v1715 = vld [vmem:[#allocation10 + $0x3f0] sm:$0xff]
    %v1716 = vld [vmem:[#allocation10 + $0x3f8] sm:$0xff]
    %v1845 = vunpack.c.l.b16 %v1589
    %v1846 = vunpack.c.h.b16 %v1589
    %v1847 = vunpack.c.l.b16 %v1590
    %v1848 = vunpack.c.h.b16 %v1590
    %v1849 = vunpack.c.l.b16 %v1591
    %v1850 = vunpack.c.h.b16 %v1591
    %v1851 = vunpack.c.l.b16 %v1592
    %v1852 = vunpack.c.h.b16 %v1592
    %v1853 = vunpack.c.l.b16 %v1593
    %v1854 = vunpack.c.h.b16 %v1593
    %v1855 = vunpack.c.l.b16 %v1594
    %v1856 = vunpack.c.h.b16 %v1594
    %v1857 = vunpack.c.l.b16 %v1595
    %v1858 = vunpack.c.h.b16 %v1595
    %v1859 = vunpack.c.l.b16 %v1596
    %v1860 = vunpack.c.h.b16 %v1596
    %v1861 = vunpack.c.l.b16 %v1597
    %v1862 = vunpack.c.h.b16 %v1597
    %v1863 = vunpack.c.l.b16 %v1598
    %v1864 = vunpack.c.h.b16 %v1598
    %v1865 = vunpack.c.l.b16 %v1599
    %v1866 = vunpack.c.h.b16 %v1599
    %v1867 = vunpack.c.l.b16 %v1600
    %v1868 = vunpack.c.h.b16 %v1600
    %v1869 = vunpack.c.l.b16 %v1601
    %v1870 = vunpack.c.h.b16 %v1601
    %v1871 = vunpack.c.l.b16 %v1602
    %v1872 = vunpack.c.h.b16 %v1602
    %v1873 = vunpack.c.l.b16 %v1603
    %v1874 = vunpack.c.h.b16 %v1603
    %v1875 = vunpack.c.l.b16 %v1604
    %v1876 = vunpack.c.h.b16 %v1604
    %v1877 = vunpack.c.l.b16 %v1605
    %v1878 = vunpack.c.h.b16 %v1605
    %v1879 = vunpack.c.l.b16 %v1606
    %v1880 = vunpack.c.h.b16 %v1606
    %v1881 = vunpack.c.l.b16 %v1607
    %v1882 = vunpack.c.h.b16 %v1607
    %v1883 = vunpack.c.l.b16 %v1608
    %v1884 = vunpack.c.h.b16 %v1608
    %v1885 = vunpack.c.l.b16 %v1609
    %v1886 = vunpack.c.h.b16 %v1609
    %v1887 = vunpack.c.l.b16 %v1610
    %v1888 = vunpack.c.h.b16 %v1610
    %v1889 = vunpack.c.l.b16 %v1611
    %v1890 = vunpack.c.h.b16 %v1611
    %v1891 = vunpack.c.l.b16 %v1612
    %v1892 = vunpack.c.h.b16 %v1612
    %v1893 = vunpack.c.l.b16 %v1613
    %v1894 = vunpack.c.h.b16 %v1613
    %v1895 = vunpack.c.l.b16 %v1614
    %v1896 = vunpack.c.h.b16 %v1614
    %v1897 = vunpack.c.l.b16 %v1615
    %v1898 = vunpack.c.h.b16 %v1615
    %v1899 = vunpack.c.l.b16 %v1616
    %v1900 = vunpack.c.h.b16 %v1616
    %v1901 = vunpack.c.l.b16 %v1617
    %v1902 = vunpack.c.h.b16 %v1617
    %v1903 = vunpack.c.l.b16 %v1618
    %v1904 = vunpack.c.h.b16 %v1618
    %v1905 = vunpack.c.l.b16 %v1619
    %v1906 = vunpack.c.h.b16 %v1619
    %v1907 = vunpack.c.l.b16 %v1620
    %v1908 = vunpack.c.h.b16 %v1620
    %v1909 = vunpack.c.l.b16 %v1621
    %v1910 = vunpack.c.h.b16 %v1621
    %v1911 = vunpack.c.l.b16 %v1622
    %v1912 = vunpack.c.h.b16 %v1622
    %v1913 = vunpack.c.l.b16 %v1623
    %v1914 = vunpack.c.h.b16 %v1623
    %v1915 = vunpack.c.l.b16 %v1624
    %v1916 = vunpack.c.h.b16 %v1624
    %v1917 = vunpack.c.l.b16 %v1625
    %v1918 = vunpack.c.h.b16 %v1625
    %v1919 = vunpack.c.l.b16 %v1626
    %v1920 = vunpack.c.h.b16 %v1626
    %v1921 = vunpack.c.l.b16 %v1627
    %v1922 = vunpack.c.h.b16 %v1627
    %v1923 = vunpack.c.l.b16 %v1628
    %v1924 = vunpack.c.h.b16 %v1628
    %v1925 = vunpack.c.l.b16 %v1629
    %v1926 = vunpack.c.h.b16 %v1629
    %v1927 = vunpack.c.l.b16 %v1630
    %v1928 = vunpack.c.h.b16 %v1630
    %v1929 = vunpack.c.l.b16 %v1631
    %v1930 = vunpack.c.h.b16 %v1631
    %v1931 = vunpack.c.l.b16 %v1632
    %v1932 = vunpack.c.h.b16 %v1632
    %v1933 = vunpack.c.l.b16 %v1633
    %v1934 = vunpack.c.h.b16 %v1633
    %v1935 = vunpack.c.l.b16 %v1634
    %v1936 = vunpack.c.h.b16 %v1634
    %v1937 = vunpack.c.l.b16 %v1635
    %v1938 = vunpack.c.h.b16 %v1635
    %v1939 = vunpack.c.l.b16 %v1636
    %v1940 = vunpack.c.h.b16 %v1636
    %v1941 = vunpack.c.l.b16 %v1637
    %v1942 = vunpack.c.h.b16 %v1637
    %v1943 = vunpack.c.l.b16 %v1638
    %v1944 = vunpack.c.h.b16 %v1638
    %v1945 = vunpack.c.l.b16 %v1639
    %v1946 = vunpack.c.h.b16 %v1639
    %v1947 = vunpack.c.l.b16 %v1640
    %v1948 = vunpack.c.h.b16 %v1640
    %v1949 = vunpack.c.l.b16 %v1641
    %v1950 = vunpack.c.h.b16 %v1641
    %v1951 = vunpack.c.l.b16 %v1642
    %v1952 = vunpack.c.h.b16 %v1642
    %v1953 = vunpack.c.l.b16 %v1643
    %v1954 = vunpack.c.h.b16 %v1643
    %v1955 = vunpack.c.l.b16 %v1644
    %v1956 = vunpack.c.h.b16 %v1644
    %v1957 = vunpack.c.l.b16 %v1645
    %v1958 = vunpack.c.h.b16 %v1645
    %v1959 = vunpack.c.l.b16 %v1646
    %v1960 = vunpack.c.h.b16 %v1646
    %v1961 = vunpack.c.l.b16 %v1647
    %v1962 = vunpack.c.h.b16 %v1647
    %v1963 = vunpack.c.l.b16 %v1648
    %v1964 = vunpack.c.h.b16 %v1648
    %v1965 = vunpack.c.l.b16 %v1649
    %v1966 = vunpack.c.h.b16 %v1649
    %v1967 = vunpack.c.l.b16 %v1650
    %v1968 = vunpack.c.h.b16 %v1650
    %v1969 = vunpack.c.l.b16 %v1651
    %v1970 = vunpack.c.h.b16 %v1651
    %v1971 = vunpack.c.l.b16 %v1652
    %v1972 = vunpack.c.h.b16 %v1652
    %v1973 = vunpack.c.l.b16 %v1653
    %v1974 = vunpack.c.h.b16 %v1653
    %v1975 = vunpack.c.l.b16 %v1654
    %v1976 = vunpack.c.h.b16 %v1654
    %v1977 = vunpack.c.l.b16 %v1655
    %v1978 = vunpack.c.h.b16 %v1655
    %v1979 = vunpack.c.l.b16 %v1656
    %v1980 = vunpack.c.h.b16 %v1656
    %v1981 = vunpack.c.l.b16 %v1657
    %v1982 = vunpack.c.h.b16 %v1657
    %v1983 = vunpack.c.l.b16 %v1658
    %v1984 = vunpack.c.h.b16 %v1658
    %v1985 = vunpack.c.l.b16 %v1659
    %v1986 = vunpack.c.h.b16 %v1659
    %v1987 = vunpack.c.l.b16 %v1660
    %v1988 = vunpack.c.h.b16 %v1660
    %v1989 = vunpack.c.l.b16 %v1661
    %v1990 = vunpack.c.h.b16 %v1661
    %v1991 = vunpack.c.l.b16 %v1662
    %v1992 = vunpack.c.h.b16 %v1662
    %v1993 = vunpack.c.l.b16 %v1663
    %v1994 = vunpack.c.h.b16 %v1663
    %v1995 = vunpack.c.l.b16 %v1664
    %v1996 = vunpack.c.h.b16 %v1664
    %v1997 = vunpack.c.l.b16 %v1665
    %v1998 = vunpack.c.h.b16 %v1665
    %v1999 = vunpack.c.l.b16 %v1666
    %v2000 = vunpack.c.h.b16 %v1666
    %v2001 = vunpack.c.l.b16 %v1667
    %v2002 = vunpack.c.h.b16 %v1667
    %v2003 = vunpack.c.l.b16 %v1668
    %v2004 = vunpack.c.h.b16 %v1668
    %v2005 = vunpack.c.l.b16 %v1669
    %v2006 = vunpack.c.h.b16 %v1669
    %v2007 = vunpack.c.l.b16 %v1670
    %v2008 = vunpack.c.h.b16 %v1670
    %v2009 = vunpack.c.l.b16 %v1671
    %v2010 = vunpack.c.h.b16 %v1671
    %v2011 = vunpack.c.l.b16 %v1672
    %v2012 = vunpack.c.h.b16 %v1672
    %v2013 = vunpack.c.l.b16 %v1673
    %v2014 = vunpack.c.h.b16 %v1673
    %v2015 = vunpack.c.l.b16 %v1674
    %v2016 = vunpack.c.h.b16 %v1674
    %v2017 = vunpack.c.l.b16 %v1675
    %v2018 = vunpack.c.h.b16 %v1675
    %v2019 = vunpack.c.l.b16 %v1676
    %v2020 = vunpack.c.h.b16 %v1676
    %v2021 = vunpack.c.l.b16 %v1677
    %v2022 = vunpack.c.h.b16 %v1677
    %v2023 = vunpack.c.l.b16 %v1678
    %v2024 = vunpack.c.h.b16 %v1678
    %v2025 = vunpack.c.l.b16 %v1679
    %v2026 = vunpack.c.h.b16 %v1679
    %v2027 = vunpack.c.l.b16 %v1680
    %v2028 = vunpack.c.h.b16 %v1680
    %v2029 = vunpack.c.l.b16 %v1681
    %v2030 = vunpack.c.h.b16 %v1681
    %v2031 = vunpack.c.l.b16 %v1682
    %v2032 = vunpack.c.h.b16 %v1682
    %v2033 = vunpack.c.l.b16 %v1683
    %v2034 = vunpack.c.h.b16 %v1683
    %v2035 = vunpack.c.l.b16 %v1684
    %v2036 = vunpack.c.h.b16 %v1684
    %v2037 = vunpack.c.l.b16 %v1685
    %v2038 = vunpack.c.h.b16 %v1685
    %v2039 = vunpack.c.l.b16 %v1686
    %v2040 = vunpack.c.h.b16 %v1686
    %v2041 = vunpack.c.l.b16 %v1687
    %v2042 = vunpack.c.h.b16 %v1687
    %v2043 = vunpack.c.l.b16 %v1688
    %v2044 = vunpack.c.h.b16 %v1688
    %v2045 = vunpack.c.l.b16 %v1689
    %v2046 = vunpack.c.h.b16 %v1689
    %v2047 = vunpack.c.l.b16 %v1690
    %v2048 = vunpack.c.h.b16 %v1690
    %v2049 = vunpack.c.l.b16 %v1691
    %v2050 = vunpack.c.h.b16 %v1691
    %v2051 = vunpack.c.l.b16 %v1692
    %v2052 = vunpack.c.h.b16 %v1692
    %v2053 = vunpack.c.l.b16 %v1693
    %v2054 = vunpack.c.h.b16 %v1693
    %v2055 = vunpack.c.l.b16 %v1694
    %v2056 = vunpack.c.h.b16 %v1694
    %v2057 = vunpack.c.l.b16 %v1695
    %v2058 = vunpack.c.h.b16 %v1695
    %v2059 = vunpack.c.l.b16 %v1696
    %v2060 = vunpack.c.h.b16 %v1696
    %v2061 = vunpack.c.l.b16 %v1697
    %v2062 = vunpack.c.h.b16 %v1697
    %v2063 = vunpack.c.l.b16 %v1698
    %v2064 = vunpack.c.h.b16 %v1698
    %v2065 = vunpack.c.l.b16 %v1699
    %v2066 = vunpack.c.h.b16 %v1699
    %v2067 = vunpack.c.l.b16 %v1700
    %v2068 = vunpack.c.h.b16 %v1700
    %v2069 = vunpack.c.l.b16 %v1701
    %v2070 = vunpack.c.h.b16 %v1701
    %v2071 = vunpack.c.l.b16 %v1702
    %v2072 = vunpack.c.h.b16 %v1702
    %v2073 = vunpack.c.l.b16 %v1703
    %v2074 = vunpack.c.h.b16 %v1703
    %v2075 = vunpack.c.l.b16 %v1704
    %v2076 = vunpack.c.h.b16 %v1704
    %v2077 = vunpack.c.l.b16 %v1705
    %v2078 = vunpack.c.h.b16 %v1705
    %v2079 = vunpack.c.l.b16 %v1706
    %v2080 = vunpack.c.h.b16 %v1706
    %v2081 = vunpack.c.l.b16 %v1707
    %v2082 = vunpack.c.h.b16 %v1707
    %v2083 = vunpack.c.l.b16 %v1708
    %v2084 = vunpack.c.h.b16 %v1708
    %v2085 = vunpack.c.l.b16 %v1709
    %v2086 = vunpack.c.h.b16 %v1709
    %v2087 = vunpack.c.l.b16 %v1710
    %v2088 = vunpack.c.h.b16 %v1710
    %v2089 = vunpack.c.l.b16 %v1711
    %v2090 = vunpack.c.h.b16 %v1711
    %v2091 = vunpack.c.l.b16 %v1712
    %v2092 = vunpack.c.h.b16 %v1712
    %v2093 = vunpack.c.l.b16 %v1713
    %v2094 = vunpack.c.h.b16 %v1713
    %v2095 = vunpack.c.l.b16 %v1714
    %v2096 = vunpack.c.h.b16 %v1714
    %v2097 = vunpack.c.l.b16 %v1715
    %v2098 = vunpack.c.h.b16 %v1715
    %v2099 = vunpack.c.l.b16 %v1716
    %v2100 = vunpack.c.h.b16 %v1716
    %v2101 = vpack.c.b16 %v1849, %v1845
    %v2102 = vpack.c.b16 %v1850, %v1846
    %v2103 = vpack.c.b16 %v1851, %v1847
    %v2104 = vpack.c.b16 %v1852, %v1848
    %v2105 = vpack.c.b16 %v1857, %v1853
    %v2106 = vpack.c.b16 %v1858, %v1854
    %v2107 = vpack.c.b16 %v1859, %v1855
    %v2108 = vpack.c.b16 %v1860, %v1856
    %v2109 = vpack.c.b16 %v1865, %v1861
    %v2110 = vpack.c.b16 %v1866, %v1862
    %v2111 = vpack.c.b16 %v1867, %v1863
    %v2112 = vpack.c.b16 %v1868, %v1864
    %v2113 = vpack.c.b16 %v1873, %v1869
    %v2114 = vpack.c.b16 %v1874, %v1870
    %v2115 = vpack.c.b16 %v1875, %v1871
    %v2116 = vpack.c.b16 %v1876, %v1872
    %v2117 = vpack.c.b16 %v1881, %v1877
    %v2118 = vpack.c.b16 %v1882, %v1878
    %v2119 = vpack.c.b16 %v1883, %v1879
    %v2120 = vpack.c.b16 %v1884, %v1880
    %v2121 = vpack.c.b16 %v1889, %v1885
    %v2122 = vpack.c.b16 %v1890, %v1886
    %v2123 = vpack.c.b16 %v1891, %v1887
    %v2124 = vpack.c.b16 %v1892, %v1888
    %v2125 = vpack.c.b16 %v1897, %v1893
    %v2126 = vpack.c.b16 %v1898, %v1894
    %v2127 = vpack.c.b16 %v1899, %v1895
    %v2128 = vpack.c.b16 %v1900, %v1896
    %v2129 = vpack.c.b16 %v1905, %v1901
    %v2130 = vpack.c.b16 %v1906, %v1902
    %v2131 = vpack.c.b16 %v1907, %v1903
    %v2132 = vpack.c.b16 %v1908, %v1904
    %v2133 = vpack.c.b16 %v1913, %v1909
    %v2134 = vpack.c.b16 %v1914, %v1910
    %v2135 = vpack.c.b16 %v1915, %v1911
    %v2136 = vpack.c.b16 %v1916, %v1912
    %v2137 = vpack.c.b16 %v1921, %v1917
    %v2138 = vpack.c.b16 %v1922, %v1918
    %v2139 = vpack.c.b16 %v1923, %v1919
    %v2140 = vpack.c.b16 %v1924, %v1920
    %v2141 = vpack.c.b16 %v1929, %v1925
    %v2142 = vpack.c.b16 %v1930, %v1926
    %v2143 = vpack.c.b16 %v1931, %v1927
    %v2144 = vpack.c.b16 %v1932, %v1928
    %v2145 = vpack.c.b16 %v1937, %v1933
    %v2146 = vpack.c.b16 %v1938, %v1934
    %v2147 = vpack.c.b16 %v1939, %v1935
    %v2148 = vpack.c.b16 %v1940, %v1936
    %v2149 = vpack.c.b16 %v1945, %v1941
    %v2150 = vpack.c.b16 %v1946, %v1942
    %v2151 = vpack.c.b16 %v1947, %v1943
    %v2152 = vpack.c.b16 %v1948, %v1944
    %v2153 = vpack.c.b16 %v1953, %v1949
    %v2154 = vpack.c.b16 %v1954, %v1950
    %v2155 = vpack.c.b16 %v1955, %v1951
    %v2156 = vpack.c.b16 %v1956, %v1952
    %v2157 = vpack.c.b16 %v1961, %v1957
    %v2158 = vpack.c.b16 %v1962, %v1958
    %v2159 = vpack.c.b16 %v1963, %v1959
    %v2160 = vpack.c.b16 %v1964, %v1960
    %v2161 = vpack.c.b16 %v1969, %v1965
    %v2162 = vpack.c.b16 %v1970, %v1966
    %v2163 = vpack.c.b16 %v1971, %v1967
    %v2164 = vpack.c.b16 %v1972, %v1968
    %v2165 = vpack.c.b16 %v1977, %v1973
    %v2166 = vpack.c.b16 %v1978, %v1974
    %v2167 = vpack.c.b16 %v1979, %v1975
    %v2168 = vpack.c.b16 %v1980, %v1976
    %v2169 = vpack.c.b16 %v1985, %v1981
    %v2170 = vpack.c.b16 %v1986, %v1982
    %v2171 = vpack.c.b16 %v1987, %v1983
    %v2172 = vpack.c.b16 %v1988, %v1984
    %v2173 = vpack.c.b16 %v1993, %v1989
    %v2174 = vpack.c.b16 %v1994, %v1990
    %v2175 = vpack.c.b16 %v1995, %v1991
    %v2176 = vpack.c.b16 %v1996, %v1992
    %v2177 = vpack.c.b16 %v2001, %v1997
    %v2178 = vpack.c.b16 %v2002, %v1998
    %v2179 = vpack.c.b16 %v2003, %v1999
    %v2180 = vpack.c.b16 %v2004, %v2000
    %v2181 = vpack.c.b16 %v2009, %v2005
    %v2182 = vpack.c.b16 %v2010, %v2006
    %v2183 = vpack.c.b16 %v2011, %v2007
    %v2184 = vpack.c.b16 %v2012, %v2008
    %v2185 = vpack.c.b16 %v2017, %v2013
    %v2186 = vpack.c.b16 %v2018, %v2014
    %v2187 = vpack.c.b16 %v2019, %v2015
    %v2188 = vpack.c.b16 %v2020, %v2016
    %v2189 = vpack.c.b16 %v2025, %v2021
    %v2190 = vpack.c.b16 %v2026, %v2022
    %v2191 = vpack.c.b16 %v2027, %v2023
    %v2192 = vpack.c.b16 %v2028, %v2024
    %v2193 = vpack.c.b16 %v2033, %v2029
    %v2194 = vpack.c.b16 %v2034, %v2030
    %v2195 = vpack.c.b16 %v2035, %v2031
    %v2196 = vpack.c.b16 %v2036, %v2032
    %v2197 = vpack.c.b16 %v2041, %v2037
    %v2198 = vpack.c.b16 %v2042, %v2038
    %v2199 = vpack.c.b16 %v2043, %v2039
    %v2200 = vpack.c.b16 %v2044, %v2040
    %v2201 = vpack.c.b16 %v2049, %v2045
    %v2202 = vpack.c.b16 %v2050, %v2046
    %v2203 = vpack.c.b16 %v2051, %v2047
    %v2204 = vpack.c.b16 %v2052, %v2048
    %v2205 = vpack.c.b16 %v2057, %v2053
    %v2206 = vpack.c.b16 %v2058, %v2054
    %v2207 = vpack.c.b16 %v2059, %v2055
    %v2208 = vpack.c.b16 %v2060, %v2056
    %v2209 = vpack.c.b16 %v2065, %v2061
    %v2210 = vpack.c.b16 %v2066, %v2062
    %v2211 = vpack.c.b16 %v2067, %v2063
    %v2212 = vpack.c.b16 %v2068, %v2064
    %v2213 = vpack.c.b16 %v2073, %v2069
    %v2214 = vpack.c.b16 %v2074, %v2070
    %v2215 = vpack.c.b16 %v2075, %v2071
    %v2216 = vpack.c.b16 %v2076, %v2072
    %v2217 = vpack.c.b16 %v2081, %v2077
    %v2218 = vpack.c.b16 %v2082, %v2078
    %v2219 = vpack.c.b16 %v2083, %v2079
    %v2220 = vpack.c.b16 %v2084, %v2080
    %v2221 = vpack.c.b16 %v2089, %v2085
    %v2222 = vpack.c.b16 %v2090, %v2086
    %v2223 = vpack.c.b16 %v2091, %v2087
    %v2224 = vpack.c.b16 %v2092, %v2088
    %v2225 = vpack.c.b16 %v2097, %v2093
    %v2226 = vpack.c.b16 %v2098, %v2094
    %v2227 = vpack.c.b16 %v2099, %v2095
    %v2228 = vpack.c.b16 %v2100, %v2096
    %2357 = vmatprep.subr.bf16.mxu0 %v2102
    %2358 = vmatpush1.bf16.msra.mxu0 %v2101
    %2359 = vmatprep.subr.bf16.mxu0 %v2106
    %2360 = vmatpush1.bf16.msra.mxu0 %v2105
    %2361 = vmatprep.subr.bf16.mxu0 %v2110
    %2362 = vmatpush1.bf16.msra.mxu0 %v2109
    %2363 = vmatprep.subr.bf16.mxu0 %v2114
    %2364 = vmatpush1.bf16.msra.mxu0 %v2113
    %2365 = vmatprep.subr.bf16.mxu0 %v2118
    %2366 = vmatpush1.bf16.msra.mxu0 %v2117
    %2367 = vmatprep.subr.bf16.mxu0 %v2122
    %2368 = vmatpush1.bf16.msra.mxu0 %v2121
    %2369 = vmatprep.subr.bf16.mxu0 %v2126
    %2370 = vmatpush1.bf16.msra.mxu0 %v2125
    %2371 = vmatprep.subr.bf16.mxu0 %v2130
    %2372 = vmatpush1.bf16.msra.mxu0 %v2129
    %2373 = vmatprep.subr.bf16.mxu0 %v2134
    %2374 = vmatpush1.bf16.msra.mxu0 %v2133
    %2375 = vmatprep.subr.bf16.mxu0 %v2138
    %2376 = vmatpush1.bf16.msra.mxu0 %v2137
    %2377 = vmatprep.subr.bf16.mxu0 %v2142
    %2378 = vmatpush1.bf16.msra.mxu0 %v2141
    %2379 = vmatprep.subr.bf16.mxu0 %v2146
    %2380 = vmatpush1.bf16.msra.mxu0 %v2145
    %2381 = vmatprep.subr.bf16.mxu0 %v2150
    %2382 = vmatpush1.bf16.msra.mxu0 %v2149
    %2383 = vmatprep.subr.bf16.mxu0 %v2154
    %2384 = vmatpush1.bf16.msra.mxu0 %v2153
    %2385 = vmatprep.subr.bf16.mxu0 %v2158
    %2386 = vmatpush1.bf16.msra.mxu0 %v2157
    %2387 = vmatprep.subr.bf16.mxu0 %v2162
    %2388 = vmatpush1.bf16.msra.mxu0 %v2161
    %2389 = vmatprep.mubr.bf16.mxu0 %v1446
    %2390 = vmatmul.mubr.bf16.gmra.mrb[0].mxu0 %v1445
    %v2391 = vpop.f32.mrb[0].mxu0
    %v2392 = vadd.f32 0.0, %v2391
    %v2393 = vpop.f32.mrb[0].mxu0
    %v2394 = vadd.f32 0.0, %v2393
    %v2395 = vpop.f32.mrb[0].mxu0
    %v2396 = vadd.f32 0.0, %v2395
    %v2397 = vpop.f32.mrb[0].mxu0
    %v2398 = vadd.f32 0.0, %v2397
    %2399 = vdwg.mxu0
    %2400 = vmatprep.subr.bf16.mxu0 %v2166
    %2401 = vmatpush1.bf16.msra.mxu0 %v2165
    %2402 = vmatprep.subr.bf16.mxu0 %v2170
    %2403 = vmatpush1.bf16.msra.mxu0 %v2169
    %2404 = vmatprep.subr.bf16.mxu0 %v2174
    %2405 = vmatpush1.bf16.msra.mxu0 %v2173
    %2406 = vmatprep.subr.bf16.mxu0 %v2178
    %2407 = vmatpush1.bf16.msra.mxu0 %v2177
    %2408 = vmatprep.subr.bf16.mxu0 %v2182
    %2409 = vmatpush1.bf16.msra.mxu0 %v2181
    %2410 = vmatprep.subr.bf16.mxu0 %v2186
    %2411 = vmatpush1.bf16.msra.mxu0 %v2185
    %2412 = vmatprep.subr.bf16.mxu0 %v2190
    %2413 = vmatpush1.bf16.msra.mxu0 %v2189
    %2414 = vmatprep.subr.bf16.mxu0 %v2194
    %2415 = vmatpush1.bf16.msra.mxu0 %v2193
    %2416 = vmatprep.subr.bf16.mxu0 %v2198
    %2417 = vmatpush1.bf16.msra.mxu0 %v2197
    %2418 = vmatprep.subr.bf16.mxu0 %v2202
    %2419 = vmatpush1.bf16.msra.mxu0 %v2201
    %2420 = vmatprep.subr.bf16.mxu0 %v2206
    %2421 = vmatpush1.bf16.msra.mxu0 %v2205
    %2422 = vmatprep.subr.bf16.mxu0 %v2210
    %2423 = vmatpush1.bf16.msra.mxu0 %v2209
    %2424 = vmatprep.subr.bf16.mxu0 %v2214
    %2425 = vmatpush1.bf16.msra.mxu0 %v2213
    %2426 = vmatprep.subr.bf16.mxu0 %v2218
    %2427 = vmatpush1.bf16.msra.mxu0 %v2217
    %2428 = vmatprep.subr.bf16.mxu0 %v2222
    %2429 = vmatpush1.bf16.msra.mxu0 %v2221
    %2430 = vmatprep.subr.bf16.mxu0 %v2226
    %2431 = vmatpush1.bf16.msra.mxu0 %v2225
    %2432 = vmatprep.mubr.bf16.mxu0 %v1448
    %2433 = vmatmul.mubr.bf16.gmra.mrb[0].mxu0 %v1447
    %v2434 = vpop.f32.mrb[0].mxu0
    %v2435 = vadd.f32 %v2392, %v2434
    %v2436 = vpop.f32.mrb[0].mxu0
    %v2437 = vadd.f32 %v2394, %v2436
    %v2438 = vpop.f32.mrb[0].mxu0
    %v2439 = vadd.f32 %v2396, %v2438
    %v2440 = vpop.f32.mrb[0].mxu0
    %v2441 = vadd.f32 %v2398, %v2440
    %2442 = vdwg.mxu0
    %2443 = vmatprep.subr.bf16.mxu0 %v2104
    %2444 = vmatpush1.bf16.msra.mxu0 %v2103
    %2445 = vmatprep.subr.bf16.mxu0 %v2108
    %2446 = vmatpush1.bf16.msra.mxu0 %v2107
    %2447 = vmatprep.subr.bf16.mxu0 %v2112
    %2448 = vmatpush1.bf16.msra.mxu0 %v2111
    %2449 = vmatprep.subr.bf16.mxu0 %v2116
    %2450 = vmatpush1.bf16.msra.mxu0 %v2115
    %2451 = vmatprep.subr.bf16.mxu0 %v2120
    %2452 = vmatpush1.bf16.msra.mxu0 %v2119
    %2453 = vmatprep.subr.bf16.mxu0 %v2124
    %2454 = vmatpush1.bf16.msra.mxu0 %v2123
    %2455 = vmatprep.subr.bf16.mxu0 %v2128
    %2456 = vmatpush1.bf16.msra.mxu0 %v2127
    %2457 = vmatprep.subr.bf16.mxu0 %v2132
    %2458 = vmatpush1.bf16.msra.mxu0 %v2131
    %2459 = vmatprep.subr.bf16.mxu0 %v2136
    %2460 = vmatpush1.bf16.msra.mxu0 %v2135
    %2461 = vmatprep.subr.bf16.mxu0 %v2140
    %2462 = vmatpush1.bf16.msra.mxu0 %v2139
    %2463 = vmatprep.subr.bf16.mxu0 %v2144
    %2464 = vmatpush1.bf16.msra.mxu0 %v2143
    %2465 = vmatprep.subr.bf16.mxu0 %v2148
    %2466 = vmatpush1.bf16.msra.mxu0 %v2147
    %2467 = vmatprep.subr.bf16.mxu0 %v2152
    %2468 = vmatpush1.bf16.msra.mxu0 %v2151
    %2469 = vmatprep.subr.bf16.mxu0 %v2156
    %2470 = vmatpush1.bf16.msra.mxu0 %v2155
    %2471 = vmatprep.subr.bf16.mxu0 %v2160
    %2472 = vmatpush1.bf16.msra.mxu0 %v2159
    %2473 = vmatprep.subr.bf16.mxu0 %v2164
    %2474 = vmatpush1.bf16.msra.mxu0 %v2163
    %2475 = vmatprep.mubr.bf16.mxu0 %v1446
    %2476 = vmatmul.mubr.bf16.gmra.mrb[0].mxu0 %v1445
    %v2477 = vpop.f32.mrb[0].mxu0
    %v2478 = vadd.f32 0.0, %v2477
    %v2479 = vpop.f32.mrb[0].mxu0
    %v2480 = vadd.f32 0.0, %v2479
    %v2481 = vpop.f32.mrb[0].mxu0
    %v2482 = vadd.f32 0.0, %v2481
    %v2483 = vpop.f32.mrb[0].mxu0
    %v2484 = vadd.f32 0.0, %v2483
    %2485 = vdwg.mxu0
    %2486 = vmatprep.subr.bf16.mxu0 %v2168
    %2487 = vmatpush1.bf16.msra.mxu0 %v2167
    %2488 = vmatprep.subr.bf16.mxu0 %v2172
    %2489 = vmatpush1.bf16.msra.mxu0 %v2171
    %2490 = vmatprep.subr.bf16.mxu0 %v2176
    %2491 = vmatpush1.bf16.msra.mxu0 %v2175
    %2492 = vmatprep.subr.bf16.mxu0 %v2180
    %2493 = vmatpush1.bf16.msra.mxu0 %v2179
    %2494 = vmatprep.subr.bf16.mxu0 %v2184
    %2495 = vmatpush1.bf16.msra.mxu0 %v2183
    %2496 = vmatprep.subr.bf16.mxu0 %v2188
    %2497 = vmatpush1.bf16.msra.mxu0 %v2187
    %2498 = vmatprep.subr.bf16.mxu0 %v2192
    %2499 = vmatpush1.bf16.msra.mxu0 %v2191
    %2500 = vmatprep.subr.bf16.mxu0 %v2196
    %2501 = vmatpush1.bf16.msra.mxu0 %v2195
    %2502 = vmatprep.subr.bf16.mxu0 %v2200
    %2503 = vmatpush1.bf16.msra.mxu0 %v2199
    %2504 = vmatprep.subr.bf16.mxu0 %v2204
    %2505 = vmatpush1.bf16.msra.mxu0 %v2203
    %2506 = vmatprep.subr.bf16.mxu0 %v2208
    %2507 = vmatpush1.bf16.msra.mxu0 %v2207
    %2508 = vmatprep.subr.bf16.mxu0 %v2212
    %2509 = vmatpush1.bf16.msra.mxu0 %v2211
    %2510 = vmatprep.subr.bf16.mxu0 %v2216
    %2511 = vmatpush1.bf16.msra.mxu0 %v2215
    %2512 = vmatprep.subr.bf16.mxu0 %v2220
    %2513 = vmatpush1.bf16.msra.mxu0 %v2219
    %2514 = vmatprep.subr.bf16.mxu0 %v2224
    %2515 = vmatpush1.bf16.msra.mxu0 %v2223
    %2516 = vmatprep.subr.bf16.mxu0 %v2228
    %2517 = vmatpush1.bf16.msra.mxu0 %v2227
    %2518 = vmatprep.mubr.bf16.mxu0 %v1448
    %2519 = vmatmul.mubr.bf16.gmra.mrb[0].mxu0 %v1447
    %v2520 = vpop.f32.mrb[0].mxu0
    %v2521 = vadd.f32 %v2478, %v2520
    %v2522 = vpop.f32.mrb[0].mxu0
    %v2523 = vadd.f32 %v2480, %v2522
    %v2524 = vpop.f32.mrb[0].mxu0
    %v2525 = vadd.f32 %v2482, %v2524
    %v2526 = vpop.f32.mrb[0].mxu0
    %v2527 = vadd.f32 %v2484, %v2526
    %2528 = vdwg.mxu0
    %v2657 = vunpack.c.l.b16 %v1461
    %v2658 = vunpack.c.h.b16 %v1461
    %v2659 = vunpack.c.l.b16 %v1462
    %v2660 = vunpack.c.h.b16 %v1462
    %v2661 = vunpack.c.l.b16 %v1463
    %v2662 = vunpack.c.h.b16 %v1463
    %v2663 = vunpack.c.l.b16 %v1464
    %v2664 = vunpack.c.h.b16 %v1464
    %v2665 = vunpack.c.l.b16 %v1465
    %v2666 = vunpack.c.h.b16 %v1465
    %v2667 = vunpack.c.l.b16 %v1466
    %v2668 = vunpack.c.h.b16 %v1466
    %v2669 = vunpack.c.l.b16 %v1467
    %v2670 = vunpack.c.h.b16 %v1467
    %v2671 = vunpack.c.l.b16 %v1468
    %v2672 = vunpack.c.h.b16 %v1468
    %v2673 = vunpack.c.l.b16 %v1469
    %v2674 = vunpack.c.h.b16 %v1469
    %v2675 = vunpack.c.l.b16 %v1470
    %v2676 = vunpack.c.h.b16 %v1470
    %v2677 = vunpack.c.l.b16 %v1471
    %v2678 = vunpack.c.h.b16 %v1471
    %v2679 = vunpack.c.l.b16 %v1472
    %v2680 = vunpack.c.h.b16 %v1472
    %v2681 = vunpack.c.l.b16 %v1473
    %v2682 = vunpack.c.h.b16 %v1473
    %v2683 = vunpack.c.l.b16 %v1474
    %v2684 = vunpack.c.h.b16 %v1474
    %v2685 = vunpack.c.l.b16 %v1475
    %v2686 = vunpack.c.h.b16 %v1475
    %v2687 = vunpack.c.l.b16 %v1476
    %v2688 = vunpack.c.h.b16 %v1476
    %v2689 = vunpack.c.l.b16 %v1477
    %v2690 = vunpack.c.h.b16 %v1477
    %v2691 = vunpack.c.l.b16 %v1478
    %v2692 = vunpack.c.h.b16 %v1478
    %v2693 = vunpack.c.l.b16 %v1479
    %v2694 = vunpack.c.h.b16 %v1479
    %v2695 = vunpack.c.l.b16 %v1480
    %v2696 = vunpack.c.h.b16 %v1480
    %v2697 = vunpack.c.l.b16 %v1481
    %v2698 = vunpack.c.h.b16 %v1481
    %v2699 = vunpack.c.l.b16 %v1482
    %v2700 = vunpack.c.h.b16 %v1482
    %v2701 = vunpack.c.l.b16 %v1483
    %v2702 = vunpack.c.h.b16 %v1483
    %v2703 = vunpack.c.l.b16 %v1484
    %v2704 = vunpack.c.h.b16 %v1484
    %v2705 = vunpack.c.l.b16 %v1485
    %v2706 = vunpack.c.h.b16 %v1485
    %v2707 = vunpack.c.l.b16 %v1486
    %v2708 = vunpack.c.h.b16 %v1486
    %v2709 = vunpack.c.l.b16 %v1487
    %v2710 = vunpack.c.h.b16 %v1487
    %v2711 = vunpack.c.l.b16 %v1488
    %v2712 = vunpack.c.h.b16 %v1488
    %v2713 = vunpack.c.l.b16 %v1489
    %v2714 = vunpack.c.h.b16 %v1489
    %v2715 = vunpack.c.l.b16 %v1490
    %v2716 = vunpack.c.h.b16 %v1490
    %v2717 = vunpack.c.l.b16 %v1491
    %v2718 = vunpack.c.h.b16 %v1491
    %v2719 = vunpack.c.l.b16 %v1492
    %v2720 = vunpack.c.h.b16 %v1492
    %v2721 = vunpack.c.l.b16 %v1493
    %v2722 = vunpack.c.h.b16 %v1493
    %v2723 = vunpack.c.l.b16 %v1494
    %v2724 = vunpack.c.h.b16 %v1494
    %v2725 = vunpack.c.l.b16 %v1495
    %v2726 = vunpack.c.h.b16 %v1495
    %v2727 = vunpack.c.l.b16 %v1496
    %v2728 = vunpack.c.h.b16 %v1496
    %v2729 = vunpack.c.l.b16 %v1497
    %v2730 = vunpack.c.h.b16 %v1497
    %v2731 = vunpack.c.l.b16 %v1498
    %v2732 = vunpack.c.h.b16 %v1498
    %v2733 = vunpack.c.l.b16 %v1499
    %v2734 = vunpack.c.h.b16 %v1499
    %v2735 = vunpack.c.l.b16 %v1500
    %v2736 = vunpack.c.h.b16 %v1500
    %v2737 = vunpack.c.l.b16 %v1501
    %v2738 = vunpack.c.h.b16 %v1501
    %v2739 = vunpack.c.l.b16 %v1502
    %v2740 = vunpack.c.h.b16 %v1502
    %v2741 = vunpack.c.l.b16 %v1503
    %v2742 = vunpack.c.h.b16 %v1503
    %v2743 = vunpack.c.l.b16 %v1504
    %v2744 = vunpack.c.h.b16 %v1504
    %v2745 = vunpack.c.l.b16 %v1505
    %v2746 = vunpack.c.h.b16 %v1505
    %v2747 = vunpack.c.l.b16 %v1506
    %v2748 = vunpack.c.h.b16 %v1506
    %v2749 = vunpack.c.l.b16 %v1507
    %v2750 = vunpack.c.h.b16 %v1507
    %v2751 = vunpack.c.l.b16 %v1508
    %v2752 = vunpack.c.h.b16 %v1508
    %v2753 = vunpack.c.l.b16 %v1509
    %v2754 = vunpack.c.h.b16 %v1509
    %v2755 = vunpack.c.l.b16 %v1510
    %v2756 = vunpack.c.h.b16 %v1510
    %v2757 = vunpack.c.l.b16 %v1511
    %v2758 = vunpack.c.h.b16 %v1511
    %v2759 = vunpack.c.l.b16 %v1512
    %v2760 = vunpack.c.h.b16 %v1512
    %v2761 = vunpack.c.l.b16 %v1513
    %v2762 = vunpack.c.h.b16 %v1513
    %v2763 = vunpack.c.l.b16 %v1514
    %v2764 = vunpack.c.h.b16 %v1514
    %v2765 = vunpack.c.l.b16 %v1515
    %v2766 = vunpack.c.h.b16 %v1515
    %v2767 = vunpack.c.l.b16 %v1516
    %v2768 = vunpack.c.h.b16 %v1516
    %v2769 = vunpack.c.l.b16 %v1517
    %v2770 = vunpack.c.h.b16 %v1517
    %v2771 = vunpack.c.l.b16 %v1518
    %v2772 = vunpack.c.h.b16 %v1518
    %v2773 = vunpack.c.l.b16 %v1519
    %v2774 = vunpack.c.h.b16 %v1519
    %v2775 = vunpack.c.l.b16 %v1520
    %v2776 = vunpack.c.h.b16 %v1520
    %v2777 = vunpack.c.l.b16 %v1521
    %v2778 = vunpack.c.h.b16 %v1521
    %v2779 = vunpack.c.l.b16 %v1522
    %v2780 = vunpack.c.h.b16 %v1522
    %v2781 = vunpack.c.l.b16 %v1523
    %v2782 = vunpack.c.h.b16 %v1523
    %v2783 = vunpack.c.l.b16 %v1524
    %v2784 = vunpack.c.h.b16 %v1524
    %v2785 = vunpack.c.l.b16 %v1525
    %v2786 = vunpack.c.h.b16 %v1525
    %v2787 = vunpack.c.l.b16 %v1526
    %v2788 = vunpack.c.h.b16 %v1526
    %v2789 = vunpack.c.l.b16 %v1527
    %v2790 = vunpack.c.h.b16 %v1527
    %v2791 = vunpack.c.l.b16 %v1528
    %v2792 = vunpack.c.h.b16 %v1528
    %v2793 = vunpack.c.l.b16 %v1529
    %v2794 = vunpack.c.h.b16 %v1529
    %v2795 = vunpack.c.l.b16 %v1530
    %v2796 = vunpack.c.h.b16 %v1530
    %v2797 = vunpack.c.l.b16 %v1531
    %v2798 = vunpack.c.h.b16 %v1531
    %v2799 = vunpack.c.l.b16 %v1532
    %v2800 = vunpack.c.h.b16 %v1532
    %v2801 = vunpack.c.l.b16 %v1533
    %v2802 = vunpack.c.h.b16 %v1533
    %v2803 = vunpack.c.l.b16 %v1534
    %v2804 = vunpack.c.h.b16 %v1534
    %v2805 = vunpack.c.l.b16 %v1535
    %v2806 = vunpack.c.h.b16 %v1535
    %v2807 = vunpack.c.l.b16 %v1536
    %v2808 = vunpack.c.h.b16 %v1536
    %v2809 = vunpack.c.l.b16 %v1537
    %v2810 = vunpack.c.h.b16 %v1537
    %v2811 = vunpack.c.l.b16 %v1538
    %v2812 = vunpack.c.h.b16 %v1538
    %v2813 = vunpack.c.l.b16 %v1539
    %v2814 = vunpack.c.h.b16 %v1539
    %v2815 = vunpack.c.l.b16 %v1540
    %v2816 = vunpack.c.h.b16 %v1540
    %v2817 = vunpack.c.l.b16 %v1541
    %v2818 = vunpack.c.h.b16 %v1541
    %v2819 = vunpack.c.l.b16 %v1542
    %v2820 = vunpack.c.h.b16 %v1542
    %v2821 = vunpack.c.l.b16 %v1543
    %v2822 = vunpack.c.h.b16 %v1543
    %v2823 = vunpack.c.l.b16 %v1544
    %v2824 = vunpack.c.h.b16 %v1544
    %v2825 = vunpack.c.l.b16 %v1545
    %v2826 = vunpack.c.h.b16 %v1545
    %v2827 = vunpack.c.l.b16 %v1546
    %v2828 = vunpack.c.h.b16 %v1546
    %v2829 = vunpack.c.l.b16 %v1547
    %v2830 = vunpack.c.h.b16 %v1547
    %v2831 = vunpack.c.l.b16 %v1548
    %v2832 = vunpack.c.h.b16 %v1548
    %v2833 = vunpack.c.l.b16 %v1549
    %v2834 = vunpack.c.h.b16 %v1549
    %v2835 = vunpack.c.l.b16 %v1550
    %v2836 = vunpack.c.h.b16 %v1550
    %v2837 = vunpack.c.l.b16 %v1551
    %v2838 = vunpack.c.h.b16 %v1551
    %v2839 = vunpack.c.l.b16 %v1552
    %v2840 = vunpack.c.h.b16 %v1552
    %v2841 = vunpack.c.l.b16 %v1553
    %v2842 = vunpack.c.h.b16 %v1553
    %v2843 = vunpack.c.l.b16 %v1554
    %v2844 = vunpack.c.h.b16 %v1554
    %v2845 = vunpack.c.l.b16 %v1555
    %v2846 = vunpack.c.h.b16 %v1555
    %v2847 = vunpack.c.l.b16 %v1556
    %v2848 = vunpack.c.h.b16 %v1556
    %v2849 = vunpack.c.l.b16 %v1557
    %v2850 = vunpack.c.h.b16 %v1557
    %v2851 = vunpack.c.l.b16 %v1558
    %v2852 = vunpack.c.h.b16 %v1558
    %v2853 = vunpack.c.l.b16 %v1559
    %v2854 = vunpack.c.h.b16 %v1559
    %v2855 = vunpack.c.l.b16 %v1560
    %v2856 = vunpack.c.h.b16 %v1560
    %v2857 = vunpack.c.l.b16 %v1561
    %v2858 = vunpack.c.h.b16 %v1561
    %v2859 = vunpack.c.l.b16 %v1562
    %v2860 = vunpack.c.h.b16 %v1562
    %v2861 = vunpack.c.l.b16 %v1563
    %v2862 = vunpack.c.h.b16 %v1563
    %v2863 = vunpack.c.l.b16 %v1564
    %v2864 = vunpack.c.h.b16 %v1564
    %v2865 = vunpack.c.l.b16 %v1565
    %v2866 = vunpack.c.h.b16 %v1565
    %v2867 = vunpack.c.l.b16 %v1566
    %v2868 = vunpack.c.h.b16 %v1566
    %v2869 = vunpack.c.l.b16 %v1567
    %v2870 = vunpack.c.h.b16 %v1567
    %v2871 = vunpack.c.l.b16 %v1568
    %v2872 = vunpack.c.h.b16 %v1568
    %v2873 = vunpack.c.l.b16 %v1569
    %v2874 = vunpack.c.h.b16 %v1569
    %v2875 = vunpack.c.l.b16 %v1570
    %v2876 = vunpack.c.h.b16 %v1570
    %v2877 = vunpack.c.l.b16 %v1571
    %v2878 = vunpack.c.h.b16 %v1571
    %v2879 = vunpack.c.l.b16 %v1572
    %v2880 = vunpack.c.h.b16 %v1572
    %v2881 = vunpack.c.l.b16 %v1573
    %v2882 = vunpack.c.h.b16 %v1573
    %v2883 = vunpack.c.l.b16 %v1574
    %v2884 = vunpack.c.h.b16 %v1574
    %v2885 = vunpack.c.l.b16 %v1575
    %v2886 = vunpack.c.h.b16 %v1575
    %v2887 = vunpack.c.l.b16 %v1576
    %v2888 = vunpack.c.h.b16 %v1576
    %v2889 = vunpack.c.l.b16 %v1577
    %v2890 = vunpack.c.h.b16 %v1577
    %v2891 = vunpack.c.l.b16 %v1578
    %v2892 = vunpack.c.h.b16 %v1578
    %v2893 = vunpack.c.l.b16 %v1579
    %v2894 = vunpack.c.h.b16 %v1579
    %v2895 = vunpack.c.l.b16 %v1580
    %v2896 = vunpack.c.h.b16 %v1580
    %v2897 = vunpack.c.l.b16 %v1581
    %v2898 = vunpack.c.h.b16 %v1581
    %v2899 = vunpack.c.l.b16 %v1582
    %v2900 = vunpack.c.h.b16 %v1582
    %v2901 = vunpack.c.l.b16 %v1583
    %v2902 = vunpack.c.h.b16 %v1583
    %v2903 = vunpack.c.l.b16 %v1584
    %v2904 = vunpack.c.h.b16 %v1584
    %v2905 = vunpack.c.l.b16 %v1585
    %v2906 = vunpack.c.h.b16 %v1585
    %v2907 = vunpack.c.l.b16 %v1586
    %v2908 = vunpack.c.h.b16 %v1586
    %v2909 = vunpack.c.l.b16 %v1587
    %v2910 = vunpack.c.h.b16 %v1587
    %v2911 = vunpack.c.l.b16 %v1588
    %v2912 = vunpack.c.h.b16 %v1588
    %v2913 = vpack.c.b16 %v2661, %v2657
    %v2914 = vpack.c.b16 %v2662, %v2658
    %v2915 = vpack.c.b16 %v2663, %v2659
    %v2916 = vpack.c.b16 %v2664, %v2660
    %v2917 = vpack.c.b16 %v2669, %v2665
    %v2918 = vpack.c.b16 %v2670, %v2666
    %v2919 = vpack.c.b16 %v2671, %v2667
    %v2920 = vpack.c.b16 %v2672, %v2668
    %v2921 = vpack.c.b16 %v2677, %v2673
    %v2922 = vpack.c.b16 %v2678, %v2674
    %v2923 = vpack.c.b16 %v2679, %v2675
    %v2924 = vpack.c.b16 %v2680, %v2676
    %v2925 = vpack.c.b16 %v2685, %v2681
    %v2926 = vpack.c.b16 %v2686, %v2682
    %v2927 = vpack.c.b16 %v2687, %v2683
    %v2928 = vpack.c.b16 %v2688, %v2684
    %v2929 = vpack.c.b16 %v2693, %v2689
    %v2930 = vpack.c.b16 %v2694, %v2690
    %v2931 = vpack.c.b16 %v2695, %v2691
    %v2932 = vpack.c.b16 %v2696, %v2692
    %v2933 = vpack.c.b16 %v2701, %v2697
    %v2934 = vpack.c.b16 %v2702, %v2698
    %v2935 = vpack.c.b16 %v2703, %v2699
    %v2936 = vpack.c.b16 %v2704, %v2700
    %v2937 = vpack.c.b16 %v2709, %v2705
    %v2938 = vpack.c.b16 %v2710, %v2706
    %v2939 = vpack.c.b16 %v2711, %v2707
    %v2940 = vpack.c.b16 %v2712, %v2708
    %v2941 = vpack.c.b16 %v2717, %v2713
    %v2942 = vpack.c.b16 %v2718, %v2714
    %v2943 = vpack.c.b16 %v2719, %v2715
    %v2944 = vpack.c.b16 %v2720, %v2716
    %v2945 = vpack.c.b16 %v2725, %v2721
    %v2946 = vpack.c.b16 %v2726, %v2722
    %v2947 = vpack.c.b16 %v2727, %v2723
    %v2948 = vpack.c.b16 %v2728, %v2724
    %v2949 = vpack.c.b16 %v2733, %v2729
    %v2950 = vpack.c.b16 %v2734, %v2730
    %v2951 = vpack.c.b16 %v2735, %v2731
    %v2952 = vpack.c.b16 %v2736, %v2732
    %v2953 = vpack.c.b16 %v2741, %v2737
    %v2954 = vpack.c.b16 %v2742, %v2738
    %v2955 = vpack.c.b16 %v2743, %v2739
    %v2956 = vpack.c.b16 %v2744, %v2740
    %v2957 = vpack.c.b16 %v2749, %v2745
    %v2958 = vpack.c.b16 %v2750, %v2746
    %v2959 = vpack.c.b16 %v2751, %v2747
    %v2960 = vpack.c.b16 %v2752, %v2748
    %v2961 = vpack.c.b16 %v2757, %v2753
    %v2962 = vpack.c.b16 %v2758, %v2754
    %v2963 = vpack.c.b16 %v2759, %v2755
    %v2964 = vpack.c.b16 %v2760, %v2756
    %v2965 = vpack.c.b16 %v2765, %v2761
    %v2966 = vpack.c.b16 %v2766, %v2762
    %v2967 = vpack.c.b16 %v2767, %v2763
    %v2968 = vpack.c.b16 %v2768, %v2764
    %v2969 = vpack.c.b16 %v2773, %v2769
    %v2970 = vpack.c.b16 %v2774, %v2770
    %v2971 = vpack.c.b16 %v2775, %v2771
    %v2972 = vpack.c.b16 %v2776, %v2772
    %v2973 = vpack.c.b16 %v2781, %v2777
    %v2974 = vpack.c.b16 %v2782, %v2778
    %v2975 = vpack.c.b16 %v2783, %v2779
    %v2976 = vpack.c.b16 %v2784, %v2780
    %v2977 = vpack.c.b16 %v2789, %v2785
    %v2978 = vpack.c.b16 %v2790, %v2786
    %v2979 = vpack.c.b16 %v2791, %v2787
    %v2980 = vpack.c.b16 %v2792, %v2788
    %v2981 = vpack.c.b16 %v2797, %v2793
    %v2982 = vpack.c.b16 %v2798, %v2794
    %v2983 = vpack.c.b16 %v2799, %v2795
    %v2984 = vpack.c.b16 %v2800, %v2796
    %v2985 = vpack.c.b16 %v2805, %v2801
    %v2986 = vpack.c.b16 %v2806, %v2802
    %v2987 = vpack.c.b16 %v2807, %v2803
    %v2988 = vpack.c.b16 %v2808, %v2804
    %v2989 = vpack.c.b16 %v2813, %v2809
    %v2990 = vpack.c.b16 %v2814, %v2810
    %v2991 = vpack.c.b16 %v2815, %v2811
    %v2992 = vpack.c.b16 %v2816, %v2812
    %v2993 = vpack.c.b16 %v2821, %v2817
    %v2994 = vpack.c.b16 %v2822, %v2818
    %v2995 = vpack.c.b16 %v2823, %v2819
    %v2996 = vpack.c.b16 %v2824, %v2820
    %v2997 = vpack.c.b16 %v2829, %v2825
    %v2998 = vpack.c.b16 %v2830, %v2826
    %v2999 = vpack.c.b16 %v2831, %v2827
    %v3000 = vpack.c.b16 %v2832, %v2828
    %v3001 = vpack.c.b16 %v2837, %v2833
    %v3002 = vpack.c.b16 %v2838, %v2834
    %v3003 = vpack.c.b16 %v2839, %v2835
    %v3004 = vpack.c.b16 %v2840, %v2836
    %v3005 = vpack.c.b16 %v2845, %v2841
    %v3006 = vpack.c.b16 %v2846, %v2842
    %v3007 = vpack.c.b16 %v2847, %v2843
    %v3008 = vpack.c.b16 %v2848, %v2844
    %v3009 = vpack.c.b16 %v2853, %v2849
    %v3010 = vpack.c.b16 %v2854, %v2850
    %v3011 = vpack.c.b16 %v2855, %v2851
    %v3012 = vpack.c.b16 %v2856, %v2852
    %v3013 = vpack.c.b16 %v2861, %v2857
    %v3014 = vpack.c.b16 %v2862, %v2858
    %v3015 = vpack.c.b16 %v2863, %v2859
    %v3016 = vpack.c.b16 %v2864, %v2860
    %v3017 = vpack.c.b16 %v2869, %v2865
    %v3018 = vpack.c.b16 %v2870, %v2866
    %v3019 = vpack.c.b16 %v2871, %v2867
    %v3020 = vpack.c.b16 %v2872, %v2868
    %v3021 = vpack.c.b16 %v2877, %v2873
    %v3022 = vpack.c.b16 %v2878, %v2874
    %v3023 = vpack.c.b16 %v2879, %v2875
    %v3024 = vpack.c.b16 %v2880, %v2876
    %v3025 = vpack.c.b16 %v2885, %v2881
    %v3026 = vpack.c.b16 %v2886, %v2882
    %v3027 = vpack.c.b16 %v2887, %v2883
    %v3028 = vpack.c.b16 %v2888, %v2884
    %v3029 = vpack.c.b16 %v2893, %v2889
    %v3030 = vpack.c.b16 %v2894, %v2890
    %v3031 = vpack.c.b16 %v2895, %v2891
    %v3032 = vpack.c.b16 %v2896, %v2892
    %v3033 = vpack.c.b16 %v2901, %v2897
    %v3034 = vpack.c.b16 %v2902, %v2898
    %v3035 = vpack.c.b16 %v2903, %v2899
    %v3036 = vpack.c.b16 %v2904, %v2900
    %v3037 = vpack.c.b16 %v2909, %v2905
    %v3038 = vpack.c.b16 %v2910, %v2906
    %v3039 = vpack.c.b16 %v2911, %v2907
    %v3040 = vpack.c.b16 %v2912, %v2908
    %3169 = vmatprep.subr.bf16.mxu0 %v2914
    %3170 = vmatpush1.bf16.msra.mxu0 %v2913
    %3171 = vmatprep.subr.bf16.mxu0 %v2918
    %3172 = vmatpush1.bf16.msra.mxu0 %v2917
    %3173 = vmatprep.subr.bf16.mxu0 %v2922
    %3174 = vmatpush1.bf16.msra.mxu0 %v2921
    %3175 = vmatprep.subr.bf16.mxu0 %v2926
    %3176 = vmatpush1.bf16.msra.mxu0 %v2925
    %3177 = vmatprep.subr.bf16.mxu0 %v2930
    %3178 = vmatpush1.bf16.msra.mxu0 %v2929
    %3179 = vmatprep.subr.bf16.mxu0 %v2934
    %3180 = vmatpush1.bf16.msra.mxu0 %v2933
    %3181 = vmatprep.subr.bf16.mxu0 %v2938
    %3182 = vmatpush1.bf16.msra.mxu0 %v2937
    %3183 = vmatprep.subr.bf16.mxu0 %v2942
    %3184 = vmatpush1.bf16.msra.mxu0 %v2941
    %3185 = vmatprep.subr.bf16.mxu0 %v2946
    %3186 = vmatpush1.bf16.msra.mxu0 %v2945
    %3187 = vmatprep.subr.bf16.mxu0 %v2950
    %3188 = vmatpush1.bf16.msra.mxu0 %v2949
    %3189 = vmatprep.subr.bf16.mxu0 %v2954
    %3190 = vmatpush1.bf16.msra.mxu0 %v2953
    %3191 = vmatprep.subr.bf16.mxu0 %v2958
    %3192 = vmatpush1.bf16.msra.mxu0 %v2957
    %3193 = vmatprep.subr.bf16.mxu0 %v2962
    %3194 = vmatpush1.bf16.msra.mxu0 %v2961
    %3195 = vmatprep.subr.bf16.mxu0 %v2966
    %3196 = vmatpush1.bf16.msra.mxu0 %v2965
    %3197 = vmatprep.subr.bf16.mxu0 %v2970
    %3198 = vmatpush1.bf16.msra.mxu0 %v2969
    %3199 = vmatprep.subr.bf16.mxu0 %v2974
    %3200 = vmatpush1.bf16.msra.mxu0 %v2973
    %3201 = vmatprep.mubr.bf16.mxu0 %v1458
    %3202 = vmatmul.mubr.bf16.gmra.mrb[0].mxu0 %v1457
    %v3203 = vpop.f32.mrb[0].mxu0
    %v3204 = vadd.f32 %v2435, %v3203
    %v3205 = vpop.f32.mrb[0].mxu0
    %v3206 = vadd.f32 %v2437, %v3205
    %v3207 = vpop.f32.mrb[0].mxu0
    %v3208 = vadd.f32 %v2439, %v3207
    %v3209 = vpop.f32.mrb[0].mxu0
    %v3210 = vadd.f32 %v2441, %v3209
    %3211 = vdwg.mxu0
    %3212 = vmatprep.subr.bf16.mxu0 %v2978
    %3213 = vmatpush1.bf16.msra.mxu0 %v2977
    %3214 = vmatprep.subr.bf16.mxu0 %v2982
    %3215 = vmatpush1.bf16.msra.mxu0 %v2981
    %3216 = vmatprep.subr.bf16.mxu0 %v2986
    %3217 = vmatpush1.bf16.msra.mxu0 %v2985
    %3218 = vmatprep.subr.bf16.mxu0 %v2990
    %3219 = vmatpush1.bf16.msra.mxu0 %v2989
    %3220 = vmatprep.subr.bf16.mxu0 %v2994
    %3221 = vmatpush1.bf16.msra.mxu0 %v2993
    %3222 = vmatprep.subr.bf16.mxu0 %v2998
    %3223 = vmatpush1.bf16.msra.mxu0 %v2997
    %3224 = vmatprep.subr.bf16.mxu0 %v3002
    %3225 = vmatpush1.bf16.msra.mxu0 %v3001
    %3226 = vmatprep.subr.bf16.mxu0 %v3006
    %3227 = vmatpush1.bf16.msra.mxu0 %v3005
    %3228 = vmatprep.subr.bf16.mxu0 %v3010
    %3229 = vmatpush1.bf16.msra.mxu0 %v3009
    %3230 = vmatprep.subr.bf16.mxu0 %v3014
    %3231 = vmatpush1.bf16.msra.mxu0 %v3013
    %3232 = vmatprep.subr.bf16.mxu0 %v3018
    %3233 = vmatpush1.bf16.msra.mxu0 %v3017
    %3234 = vmatprep.subr.bf16.mxu0 %v3022
    %3235 = vmatpush1.bf16.msra.mxu0 %v3021
    %3236 = vmatprep.subr.bf16.mxu0 %v3026
    %3237 = vmatpush1.bf16.msra.mxu0 %v3025
    %3238 = vmatprep.subr.bf16.mxu0 %v3030
    %3239 = vmatpush1.bf16.msra.mxu0 %v3029
    %3240 = vmatprep.subr.bf16.mxu0 %v3034
    %3241 = vmatpush1.bf16.msra.mxu0 %v3033
    %3242 = vmatprep.subr.bf16.mxu0 %v3038
    %3243 = vmatpush1.bf16.msra.mxu0 %v3037
    %3244 = vmatprep.mubr.bf16.mxu0 %v1460
    %3245 = vmatmul.mubr.bf16.gmra.mrb[0].mxu0 %v1459
    %v3246 = vpop.f32.mrb[0].mxu0
    %v3247 = vadd.f32 %v3204, %v3246
    %v3248 = vpop.f32.mrb[0].mxu0
    %v3249 = vadd.f32 %v3206, %v3248
    %v3250 = vpop.f32.mrb[0].mxu0
    %v3251 = vadd.f32 %v3208, %v3250
    %v3252 = vpop.f32.mrb[0].mxu0
    %v3253 = vadd.f32 %v3210, %v3252
    %3254 = vdwg.mxu0
    %3255 = vmatprep.subr.bf16.mxu0 %v2916
    %3256 = vmatpush1.bf16.msra.mxu0 %v2915
    %3257 = vmatprep.subr.bf16.mxu0 %v2920
    %3258 = vmatpush1.bf16.msra.mxu0 %v2919
    %3259 = vmatprep.subr.bf16.mxu0 %v2924
    %3260 = vmatpush1.bf16.msra.mxu0 %v2923
    %3261 = vmatprep.subr.bf16.mxu0 %v2928
    %3262 = vmatpush1.bf16.msra.mxu0 %v2927
    %3263 = vmatprep.subr.bf16.mxu0 %v2932
    %3264 = vmatpush1.bf16.msra.mxu0 %v2931
    %3265 = vmatprep.subr.bf16.mxu0 %v2936
    %3266 = vmatpush1.bf16.msra.mxu0 %v2935
    %3267 = vmatprep.subr.bf16.mxu0 %v2940
    %3268 = vmatpush1.bf16.msra.mxu0 %v2939
    %3269 = vmatprep.subr.bf16.mxu0 %v2944
    %3270 = vmatpush1.bf16.msra.mxu0 %v2943
    %3271 = vmatprep.subr.bf16.mxu0 %v2948
    %3272 = vmatpush1.bf16.msra.mxu0 %v2947
    %3273 = vmatprep.subr.bf16.mxu0 %v2952
    %3274 = vmatpush1.bf16.msra.mxu0 %v2951
    %3275 = vmatprep.subr.bf16.mxu0 %v2956
    %3276 = vmatpush1.bf16.msra.mxu0 %v2955
    %3277 = vmatprep.subr.bf16.mxu0 %v2960
    %3278 = vmatpush1.bf16.msra.mxu0 %v2959
    %3279 = vmatprep.subr.bf16.mxu0 %v2964
    %3280 = vmatpush1.bf16.msra.mxu0 %v2963
    %3281 = vmatprep.subr.bf16.mxu0 %v2968
    %3282 = vmatpush1.bf16.msra.mxu0 %v2967
    %3283 = vmatprep.subr.bf16.mxu0 %v2972
    %3284 = vmatpush1.bf16.msra.mxu0 %v2971
    %3285 = vmatprep.subr.bf16.mxu0 %v2976
    %3286 = vmatpush1.bf16.msra.mxu0 %v2975
    %3287 = vmatprep.mubr.bf16.mxu0 %v1458
    %3288 = vmatmul.mubr.bf16.gmra.mrb[0].mxu0 %v1457
    %v3289 = vpop.f32.mrb[0].mxu0
    %v3290 = vadd.f32 %v2521, %v3289
    %v3291 = vpop.f32.mrb[0].mxu0
    %v3292 = vadd.f32 %v2523, %v3291
    %v3293 = vpop.f32.mrb[0].mxu0
    %v3294 = vadd.f32 %v2525, %v3293
    %v3295 = vpop.f32.mrb[0].mxu0
    %v3296 = vadd.f32 %v2527, %v3295
    %3297 = vdwg.mxu0
    %3298 = vmatprep.subr.bf16.mxu0 %v2980
    %3299 = vmatpush1.bf16.msra.mxu0 %v2979
    %3300 = vmatprep.subr.bf16.mxu0 %v2984
    %3301 = vmatpush1.bf16.msra.mxu0 %v2983
    %3302 = vmatprep.subr.bf16.mxu0 %v2988
    %3303 = vmatpush1.bf16.msra.mxu0 %v2987
    %3304 = vmatprep.subr.bf16.mxu0 %v2992
    %3305 = vmatpush1.bf16.msra.mxu0 %v2991
    %3306 = vmatprep.subr.bf16.mxu0 %v2996
    %3307 = vmatpush1.bf16.msra.mxu0 %v2995
    %3308 = vmatprep.subr.bf16.mxu0 %v3000
    %3309 = vmatpush1.bf16.msra.mxu0 %v2999
    %3310 = vmatprep.subr.bf16.mxu0 %v3004
    %3311 = vmatpush1.bf16.msra.mxu0 %v3003
    %3312 = vmatprep.subr.bf16.mxu0 %v3008
    %3313 = vmatpush1.bf16.msra.mxu0 %v3007
    %3314 = vmatprep.subr.bf16.mxu0 %v3012
    %3315 = vmatpush1.bf16.msra.mxu0 %v3011
    %3316 = vmatprep.subr.bf16.mxu0 %v3016
    %3317 = vmatpush1.bf16.msra.mxu0 %v3015
    %3318 = vmatprep.subr.bf16.mxu0 %v3020
    %3319 = vmatpush1.bf16.msra.mxu0 %v3019
    %3320 = vmatprep.subr.bf16.mxu0 %v3024
    %3321 = vmatpush1.bf16.msra.mxu0 %v3023
    %3322 = vmatprep.subr.bf16.mxu0 %v3028
    %3323 = vmatpush1.bf16.msra.mxu0 %v3027
    %3324 = vmatprep.subr.bf16.mxu0 %v3032
    %3325 = vmatpush1.bf16.msra.mxu0 %v3031
    %3326 = vmatprep.subr.bf16.mxu0 %v3036
    %3327 = vmatpush1.bf16.msra.mxu0 %v3035
    %3328 = vmatprep.subr.bf16.mxu0 %v3040
    %3329 = vmatpush1.bf16.msra.mxu0 %v3039
    %3330 = vmatprep.mubr.bf16.mxu0 %v1460
    %3331 = vmatmul.mubr.bf16.gmra.mrb[0].mxu0 %v1459
    %v3332 = vpop.f32.mrb[0].mxu0
    %v3333 = vadd.f32 %v3290, %v3332
    %v3334 = vpop.f32.mrb[0].mxu0
    %v3335 = vadd.f32 %v3292, %v3334
    %v3336 = vpop.f32.mrb[0].mxu0
    %v3337 = vadd.f32 %v3294, %v3336
    %v3338 = vpop.f32.mrb[0].mxu0
    %v3339 = vadd.f32 %v3296, %v3338
    %3340 = vdwg.mxu0
    %v3341 = vld [vmem:[%s6] sm:$0xf]
    %v3343 = vlaneseq
    %v3344 = vshrl.u32 %v3343, 7
    %v3345 = vsub.s32 0, %v3344
    %v3346 = vrot.slane %v3341, %v3345
    %v3347 = vlaneseq
    %v3348 = vshrl.u32 %v3347, 7
    %v3349 = vsub.s32 1, %v3348
    %v3350 = vrot.slane %v3341, %v3349
    %v3351 = vlaneseq
    %v3352 = vshrl.u32 %v3351, 7
    %v3353 = vsub.s32 2, %v3352
    %v3354 = vrot.slane %v3341, %v3353
    %v3355 = vlaneseq
    %v3356 = vshrl.u32 %v3355, 7
    %v3357 = vsub.s32 3, %v3356
    %v3358 = vrot.slane %v3341, %v3357
    %v3363 = vadd.f32 %v3247, %v3346
    %v3364 = vadd.f32 %v3249, %v3350
    %v3365 = vadd.f32 %v3333, %v3354
    %v3366 = vadd.f32 %v3335, %v3358
    %v3367 = vadd.f32 %v3251, %v3346
    %v3368 = vadd.f32 %v3253, %v3350
    %v3369 = vadd.f32 %v3337, %v3354
    %v3370 = vadd.f32 %v3339, %v3358
    %3371 = vst [vmem:[#allocation11] sm:$0xff] %v3363
    %3372 = vst [vmem:[#allocation11 + $0x8] sm:$0xff] %v3364
    %3373 = vst [vmem:[#allocation11 + $0x10] sm:$0xff] %v3365
    %3374 = vst [vmem:[#allocation11 + $0x18] sm:$0xff] %v3366
    %3375 = vst [vmem:[#allocation11 + $0x20] sm:$0xff] %v3367
    %3376 = vst [vmem:[#allocation11 + $0x28] sm:$0xff] %v3368
    %3377 = vst [vmem:[#allocation11 + $0x30] sm:$0xff] %v3369
    %3378 = vst [vmem:[#allocation11 + $0x38] sm:$0xff] %v3370
    // Predicated region
    $region50: #{tpu_custom_call.1} parent=1 // pred_check
      _
    $region51: #{tpu_custom_call.1} parent=1 // pred_check_branch
      %3380 = sbr.rel (0) target = $region53
    $region52: #{tpu_custom_call.1} parent=1 // pred_region
      %s3382 = ssub.s32 1024, 1024
      %3383 = vsyncadd [#allocation4], %s3382
      %s3384 = sshll.u32 [#allocation11], 4
      %s3385 = int_to_ptr.vmem [resolvable:$true] %s3384
      %3390 = dma.vmem_to_hbm [thread:$0]  %s3385, 1024, %s7, [#allocation4], 512, 512, 32
    $region53: #{tpu_custom_call.1} parent=1 // pred_fallthru
      _
    // Predicated region
    $region54: #{tpu_custom_call.1} parent=1 // pred_check
      _
    $region55: #{tpu_custom_call.1} parent=1 // pred_check_branch
      %3392 = sbr.rel (0) target = $region57
    $region56: #{tpu_custom_call.1} parent=1 // pred_region
      %3393 = dma.done [#allocation4], 1024
    $region57: #{tpu_custom_call.1} parent=1 // pred_fallthru
      _
    %3394 = vsyncpa [#allocation3], 1
    %3395 = vsyncpa [#allocation6], 1
    %3396 = vsyncpa [#allocation9], 1
    %3397 = vsyncpa [#allocation4], 1

</llo_original>
